<compile_context>
chip_gen: v6e
topology: v6e:2x2x1
jax: 0.10.0
libtpu: 0.0.40
codegen_flags: <defaults>
</compile_context>

<pallas_src>
import functools

import jax
import jax.numpy as jnp
from jax.experimental import pallas as pl
from jax.experimental.pallas import tpu as pltpu


# ----------------------------------------------------------------------------
# Kernels
# ----------------------------------------------------------------------------
def _pool_proj_single_kernel(x_ref, w_ref, o_ref, *, inv_hw):
    """Single channel step.  Grid = (batch_blocks,).

    x_ref: (bt, HW, C)  channels-last feature-map block (C on lanes)
    w_ref: (C, D)       projection weight, [C, D] layout (constant block index)
    o_ref: (bt, D)      output embeddings for this batch block
    """
    pooled = jnp.sum(x_ref[...], axis=1, dtype=jnp.float32)            # (bt, C)
    proj = jnp.dot(pooled, w_ref[...], preferred_element_type=jnp.float32)
    o_ref[...] = (proj * inv_hw).astype(o_ref.dtype)


def _pool_proj_multi_kernel(x_ref, w_ref, o_ref, acc_ref, *, inv_hw):
    """Multi channel step.  Grid = (batch_blocks, channel_blocks); channel axis
    (last) is the reduction.

    x_ref  : (bt, HW, tc)  feature-map chunk (channel chunk on lanes)
    w_ref  : (tc, D)       matching weight chunk
    o_ref  : (bt, D)
    acc_ref: (bt, D) f32   accumulator across channel chunks
    """
    k = pl.program_id(1)

    @pl.when(k == 0)
    def _():
        acc_ref[...] = jnp.zeros_like(acc_ref)

    pooled = jnp.sum(x_ref[...], axis=1, dtype=jnp.float32)            # (bt, tc)
    acc_ref[...] += jnp.dot(pooled, w_ref[...],
                            preferred_element_type=jnp.float32)        # (bt, D)

    @pl.when(k == pl.num_programs(1) - 1)
    def _():
        o_ref[...] = (acc_ref[...] * inv_hw).astype(o_ref.dtype)


# ----------------------------------------------------------------------------
# Tile / VMEM sizing
# ----------------------------------------------------------------------------
def _round_up(x, m):
    return (x + m - 1) // m * m


def _vmem_budget():
    """(vmem_limit_bytes, tile_budget_bytes) — generation aware."""
    try:
        info = pltpu.get_tpu_info()
        phys = int(getattr(info, "vmem_capacity_bytes", 64 * 1024 * 1024))
    except Exception:  # no TPU info available -> assume the smallest (v7x per-TC)
        phys = 64 * 1024 * 1024
    vmem_limit = min((phys * 3) // 4, 100 * 1024 * 1024)  # ~48 MiB v7x, ~96 MiB v5e/v6e
    budget = vmem_limit - 4 * 1024 * 1024                 # headroom for Mosaic internals
    return vmem_limit, budget


def _block_bytes(bt, tc, HW, D, x_item, w_item):
    x_blk = 2 * bt * _round_up(HW, 8) * tc * x_item            # double-buffered input tile
    w_blk = 2 * _round_up(tc, 8) * _round_up(D, 128) * w_item  # double-buffered weight chunk
    o_blk = 3 * _round_up(bt, 8) * _round_up(D, 128) * 4       # output (x2) + f32 accumulator
    return x_blk + w_blk + o_blk


def _choose_tiles(B, HW, C, D, x_item, w_item, budget):
    """Returns (bt, tc, pad_rows).  (B + pad_rows) % bt == 0, C % tc == 0."""
    # Channel tile candidates: lane-aligned (multiple of 128) divisors of C, largest first.
    tcs = [t for t in (C, C // 2, C // 4, C // 8, C // 16)
           if t >= 128 and t % 128 == 0 and C % t == 0]
    if not tcs:
        tcs = [C]  # tiny / odd C: single full-channel block (still legal: full dim)

    # Batch tile candidates (largest first).  Keep >= 2 batch blocks when B allows
    # so the "parallel" batch axis actually feeds both v7x TensorCores.
    if B >= 8 and B % 8 == 0:
        bts = [bt for bt in (64, 32, 16, 8) if B % bt == 0]
        if B >= 16:
            pref = [bt for bt in bts if B // bt >= 2]
            bts = pref or bts
    else:
        bts = [B]  # single full-batch block (legal: equals the full array dim)

    for bt in bts:
        for tc in tcs:
            if _block_bytes(bt, tc, HW, D, x_item, w_item) <= budget:
                return bt, tc, 0

    # Fallback for awkward / huge batches: zero-pad B up to a multiple of 8 and
    # use the smallest aligned tiles.
    b_pad = _round_up(max(B, 8), 8)
    return 8, tcs[-1], b_pad - B


# ----------------------------------------------------------------------------
# Wrappers
# ----------------------------------------------------------------------------
@functools.partial(jax.jit, static_argnames=("batch_tile", "channel_tile"))
def image_embeddings(feats, proj_weight, *, batch_tile=None, channel_tile=None):
    """Pool + project (the post-hook part of ImageEmbeddings.forward).

    feats       : [B, H, W, C] or [B, HW, C] channels-last feature map
                  (what an NHWC JAX backbone hands the global-average-pool stage).
    proj_weight : [d_model, C]  (PyTorch nn.Linear weight layout, bias-free).
    returns     : [B, d_model]
    """
    if feats.ndim == 4:
        B, H, W, C = feats.shape
        HW = H * W
        # Merges the two *major* spatial dims; the minor (lane) C axis is untouched.
        x = feats.reshape(B, HW, C)
    else:
        B, HW, C = feats.shape
        x = feats
    D, C_in = proj_weight.shape
    assert C == C_in, (C, C_in)

    # One-time tiny relayout of the weight to [C, D] so the kernel contracts the
    # channel axis with a plain jnp.dot (no per-step transpose of the stationary
    # operand on the XLU).
    w_cd = proj_weight.T

    x_item = jnp.dtype(feats.dtype).itemsize
    w_item = jnp.dtype(proj_weight.dtype).itemsize
    vmem_limit, budget = _vmem_budget()

    bt, tc, pad = _choose_tiles(B, HW, C, D, x_item, w_item, budget)
    if batch_tile is not None:
        bt, pad = batch_tile, 0
    if channel_tile is not None:
        tc = channel_tile
    assert C % tc == 0
    assert tc % 128 == 0 or tc == C  # keep lane-aligned channel chunks

    if pad:
        x = jnp.pad(x, ((0, pad), (0, 0), (0, 0)))
    Bp = B + pad
    assert Bp % bt == 0

    nb = Bp // bt
    nkc = C // tc
    inv_hw = 1.0 / HW
    out_dtype = feats.dtype

    cost = pl.CostEstimate(
        flops=2 * Bp * C * HW + 2 * Bp * C * D,
        transcendentals=0,
        bytes_accessed=(Bp * HW * C * x_item
                        + C * D * w_item
                        + Bp * D * jnp.dtype(out_dtype).itemsize),
    )

    if nkc == 1:
        # Accumulator-free fast path (common case: whole C=2048 fits one block).
        out = pl.pallas_call(
            functools.partial(_pool_proj_single_kernel, inv_hw=inv_hw),
            out_shape=jax.ShapeDtypeStruct((Bp, D), out_dtype),
            grid_spec=pltpu.PrefetchScalarGridSpec(
                num_scalar_prefetch=0,
                grid=(nb,),
                in_specs=[
                    pl.BlockSpec((bt, HW, C), lambda b: (b, 0, 0)),
                    pl.BlockSpec((C, D), lambda b: (0, 0)),
                ],
                out_specs=pl.BlockSpec((bt, D), lambda b: (b, 0)),
            ),
            compiler_params=pltpu.CompilerParams(
                dimension_semantics=("parallel",),
                vmem_limit_bytes=vmem_limit,
            ),
            cost_estimate=cost,
        )(x, w_cd)
    else:
        out = pl.pallas_call(
            functools.partial(_pool_proj_multi_kernel, inv_hw=inv_hw),
            out_shape=jax.ShapeDtypeStruct((Bp, D), out_dtype),
            grid_spec=pltpu.PrefetchScalarGridSpec(
                num_scalar_prefetch=0,
                grid=(nb, nkc),
                in_specs=[
                    pl.BlockSpec((bt, HW, tc), lambda b, k: (b, 0, k)),
                    pl.BlockSpec((tc, D), lambda b, k: (k, 0)),
                ],
                out_specs=pl.BlockSpec((bt, D), lambda b, k: (b, 0)),
                scratch_shapes=[pltpu.VMEM((bt, D), jnp.float32)],
            ),
            compiler_params=pltpu.CompilerParams(
                dimension_semantics=("parallel", "arbitrary"),
                vmem_limit_bytes=vmem_limit,
            ),
            cost_estimate=cost,
        )(x, w_cd)

    return out[:B] if pad else out


def image_embeddings_nchw(feats_nchw, proj_weight, **kwargs):
    """Parity entry point for the PyTorch hook layout [B, C, H, W].

    The transpose to channels-last is an explicit one-time XLA relayout of the
    feature map (one extra HBM round-trip).  Prefer handing `image_embeddings`
    an NHWC feature map directly (JAX convs are NHWC by default) to keep the
    feature map read exactly once.
    """
    x = jnp.transpose(feats_nchw, (0, 2, 3, 1))
    return image_embeddings(x, proj_weight, **kwargs)


# ----------------------------------------------------------------------------
# Reference + demo
# ----------------------------------------------------------------------------
def _reference_nhwc(feats_bhwc, proj_weight):
    B = feats_bhwc.shape[0]
    C = feats_bhwc.shape[-1]
    pooled = jnp.mean(
        feats_bhwc.astype(jnp.float32).reshape(B, -1, C), axis=1)      # [B, C]
    return pooled @ proj_weight.astype(jnp.float32).T                  # [B, D]


if __name__ == "__main__":
    key = jax.random.PRNGKey(0)
    k_x, k_w = jax.random.split(key)

    B, H, W, C = 2, 8, 8, 2048      # C fixed at 2048 by nn.Linear(2048, d_model)
    d_model = 128

    feats = jax.random.normal(k_x, (B, H, W, C), dtype=jnp.float32)
    proj_w = jax.random.normal(k_w, (d_model, C), dtype=jnp.float32) * (C ** -0.5)

    ref = _reference_nhwc(feats, proj_w)

    # 1) Default (auto-tiled) path: single channel step, accumulator-free kernel.
    out = jax.block_until_ready(image_embeddings(feats, proj_w))
    assert out.shape == (B, d_model), out.shape
    assert jnp.allclose(out, ref.astype(out.dtype), atol=1e-3, rtol=1e-3), (
        float(jnp.max(jnp.abs(out - ref))))

    # 2) Forced multi-step channel reduction (exercises the accumulator kernel).
    out2 = jax.block_until_ready(image_embeddings(feats, proj_w, channel_tile=256))
    assert jnp.allclose(out2, ref.astype(out2.dtype), atol=1e-3, rtol=1e-3), (
        float(jnp.max(jnp.abs(out2 - ref))))

    # 3) NCHW adapter (PyTorch hook layout).
    feats_nchw = jnp.transpose(feats, (0, 3, 1, 2))
    out3 = jax.block_until_ready(image_embeddings_nchw(feats_nchw, proj_w))
    assert jnp.allclose(out3, ref.astype(out3.dtype), atol=1e-3, rtol=1e-3), (
        float(jnp.max(jnp.abs(out3 - ref))))

    print("KERNEL_OK")
</pallas_src>

<mosaic_0001>
module attributes {stable_mosaic.version = 11 : i64} {
  func.func @_pool_proj_single_kernel(%arg0: i32, %arg1: memref<2x64x2048xf32, #tpu.memory_space<vmem>>, %arg2: memref<2048x128xf32, #tpu.memory_space<vmem>>, %arg3: memref<2x128xf32, #tpu.memory_space<vmem>>) attributes {dimension_semantics = [#tpu.dimension_semantics<parallel>], iteration_bounds = array<i64: 1>, scalar_prefetch = 0 : i64, scratch_operands = 0 : i64, tpu.core_type = #tpu.core_type<tc>, window_params = [{transform_indices = @transform_0, window_bounds = array<i64: 2, 64, 2048>}, {pipeline_mode = #tpu.pipeline_mode<synchronous>, transform_indices = @transform_1, window_bounds = array<i64: 2048, 128>}, {transform_indices = @transform_2, window_bounds = array<i64: 2, 128>}]} {
    %c0 = arith.constant 0 : index
    %c0_0 = arith.constant 0 : index
    %c0_1 = arith.constant 0 : index
    %0 = vector.load %arg1[%c0, %c0_0, %c0_1] : memref<2x64x2048xf32, #tpu.memory_space<vmem>>, vector<2x64x2048xf32>
    %cst = arith.constant dense<0.000000e+00> : vector<2x2048xf32>
    %1 = vector.multi_reduction <add>, %0, %cst [1] : vector<2x64x2048xf32> to vector<2x2048xf32>
    %c0_2 = arith.constant 0 : index
    %c0_3 = arith.constant 0 : index
    %2 = vector.load %arg2[%c0_2, %c0_3] : memref<2048x128xf32, #tpu.memory_space<vmem>>, vector<2048x128xf32>
    %cst_4 = arith.constant dense<0.000000e+00> : vector<2x128xf32>
    %3 = tpu.matmul %1, %2, %cst_4 {dimension_numbers = #tpu.dot_dimension_numbers<[1], [0], [0], [1], [0, 0, 1, 1], [], []>} : vector<2x2048xf32>, vector<2048x128xf32>, vector<2x128xf32> -> vector<2x128xf32>
    %cst_5 = arith.constant 1.562500e-02 : f32
    %4 = vector.broadcast %cst_5 : f32 to vector<2x128xf32>
    %5 = arith.mulf %3, %4 : vector<2x128xf32>
    %c0_6 = arith.constant 0 : index
    %c0_7 = arith.constant 0 : index
    %6 = vector.load %arg3[%c0_6, %c0_7] : memref<2x128xf32, #tpu.memory_space<vmem>>, vector<2x128xf32>
    tpu.vector_store %arg3[%c0_6, %c0_7], %5 {strides = array<i32>} : memref<2x128xf32, #tpu.memory_space<vmem>>, vector<2x128xf32>,
    return
  }
  func.func @transform_0(%arg0: i32) -> (i32, i32, i32) {
    %c0_i32 = arith.constant 0 : i32
    %c0_i32_0 = arith.constant 0 : i32
    %c0_i32_1 = arith.constant 0 : i32
    return %arg0, %c0_i32, %c0_i32_0 : i32, i32, i32
  }
  func.func @transform_1(%arg0: i32) -> (i32, i32) {
    %c0_i32 = arith.constant 0 : i32
    %c0_i32_0 = arith.constant 0 : i32
    %c0_i32_1 = arith.constant 0 : i32
    return %c0_i32, %c0_i32_0 : i32, i32
  }
  func.func @transform_2(%arg0: i32) -> (i32, i32) {
    %c0_i32 = arith.constant 0 : i32
    %c0_i32_0 = arith.constant 0 : i32
    return %arg0, %c0_i32 : i32, i32
  }
}

</mosaic_0001>

<llo_original>
// kernel: image_embeddings.1
$region0: #{image_embeddings.1}
  #allocation0 [shape = 'u32[]', space=smem, size = 0x4, offset = 0x4, fixed_abs, tag = 'smem constant byte address 0x4 - core index']
  #allocation1 [shape = 'u32[144,128]{1,0:T(1,128)}', space=vmem, size = 0x12000, scoped, tag = 'internal scratch']
  %s0 = inlined_call_operand.vmem [shape: f32[2,64,2048], index: 0, kind: input, shape index: {}]
  %s1 = inlined_call_operand.vmem [shape: f32[2048,128], index: 1, kind: input, shape index: {}]
  %s2 = inlined_call_operand.hbm [shape: f32[2,128], index: 2, kind: output, shape index: {}]
  %s3 = sld [smem:[#allocation0]]
  $region18: #{image_embeddings.1} parent=0
    _
  %s5 = ssub.s32 1, %s3
  %s6 = scalar_select 0, %s5, %s3
  $region1: #{image_embeddings.1} parent=0
    #allocation2 [shape = 'u8[1024]{0}', space=vmem, size = 0x400, scoped, tag = 'output window, operand 0, single buffered']
    #allocation3 [shape = 's32[1]{0}', space=sflag, size = 0x4, scoped, tag = 'scoped memory for image_embeddings.1']
    %7 = vsyncpa [#allocation3], 0
    // Predicated region
    $region2: #{image_embeddings.1} parent=1 // pred_check
      _
    $region3: #{image_embeddings.1} parent=1 // pred_check_branch
      %9 = sbr.rel (0) target = $region5
    $region4: #{image_embeddings.1} parent=1 // pred_region
      _
    $region5: #{image_embeddings.1} parent=1 // pred_fallthru
      _
    // Predicated region
    $region6: #{image_embeddings.1} parent=1 // pred_check
      _
    $region7: #{image_embeddings.1} parent=1 // pred_check_branch
      %11 = sbr.rel (0) target = $region9
    $region8: #{image_embeddings.1} parent=1 // pred_region
      _
    $region9: #{image_embeddings.1} parent=1 // pred_fallthru
      _
    %v12 = vld [vmem:[%s0] sm:$0xff]
    %v13 = vld [vmem:[%s0 + $0x8] sm:$0xff]
    %v14 = vld [vmem:[%s0 + $0x10] sm:$0xff]
    %v15 = vld [vmem:[%s0 + $0x18] sm:$0xff]
    %v16 = vld [vmem:[%s0 + $0x20] sm:$0xff]
    %v17 = vld [vmem:[%s0 + $0x28] sm:$0xff]
    %v18 = vld [vmem:[%s0 + $0x30] sm:$0xff]
    %v19 = vld [vmem:[%s0 + $0x38] sm:$0xff]
    %v20 = vld [vmem:[%s0 + $0x40] sm:$0xff]
    %v21 = vld [vmem:[%s0 + $0x48] sm:$0xff]
    %v22 = vld [vmem:[%s0 + $0x50] sm:$0xff]
    %v23 = vld [vmem:[%s0 + $0x58] sm:$0xff]
    %v24 = vld [vmem:[%s0 + $0x60] sm:$0xff]
    %v25 = vld [vmem:[%s0 + $0x68] sm:$0xff]
    %v26 = vld [vmem:[%s0 + $0x70] sm:$0xff]
    %v27 = vld [vmem:[%s0 + $0x78] sm:$0xff]
    %v28 = vld [vmem:[%s0 + $0x80] sm:$0xff]
    %v29 = vld [vmem:[%s0 + $0x88] sm:$0xff]
    %v30 = vld [vmem:[%s0 + $0x90] sm:$0xff]
    %v31 = vld [vmem:[%s0 + $0x98] sm:$0xff]
    %v32 = vld [vmem:[%s0 + $0xa0] sm:$0xff]
    %v33 = vld [vmem:[%s0 + $0xa8] sm:$0xff]
    %v34 = vld [vmem:[%s0 + $0xb0] sm:$0xff]
    %v35 = vld [vmem:[%s0 + $0xb8] sm:$0xff]
    %v36 = vld [vmem:[%s0 + $0xc0] sm:$0xff]
    %v37 = vld [vmem:[%s0 + $0xc8] sm:$0xff]
    %v38 = vld [vmem:[%s0 + $0xd0] sm:$0xff]
    %v39 = vld [vmem:[%s0 + $0xd8] sm:$0xff]
    %v40 = vld [vmem:[%s0 + $0xe0] sm:$0xff]
    %v41 = vld [vmem:[%s0 + $0xe8] sm:$0xff]
    %v42 = vld [vmem:[%s0 + $0xf0] sm:$0xff]
    %v43 = vld [vmem:[%s0 + $0xf8] sm:$0xff]
    %v44 = vld [vmem:[%s0 + $0x100] sm:$0xff]
    %v45 = vld [vmem:[%s0 + $0x108] sm:$0xff]
    %v46 = vld [vmem:[%s0 + $0x110] sm:$0xff]
    %v47 = vld [vmem:[%s0 + $0x118] sm:$0xff]
    %v48 = vld [vmem:[%s0 + $0x120] sm:$0xff]
    %v49 = vld [vmem:[%s0 + $0x128] sm:$0xff]
    %v50 = vld [vmem:[%s0 + $0x130] sm:$0xff]
    %v51 = vld [vmem:[%s0 + $0x138] sm:$0xff]
    %v52 = vld [vmem:[%s0 + $0x140] sm:$0xff]
    %v53 = vld [vmem:[%s0 + $0x148] sm:$0xff]
    %v54 = vld [vmem:[%s0 + $0x150] sm:$0xff]
    %v55 = vld [vmem:[%s0 + $0x158] sm:$0xff]
    %v56 = vld [vmem:[%s0 + $0x160] sm:$0xff]
    %v57 = vld [vmem:[%s0 + $0x168] sm:$0xff]
    %v58 = vld [vmem:[%s0 + $0x170] sm:$0xff]
    %v59 = vld [vmem:[%s0 + $0x178] sm:$0xff]
    %v60 = vld [vmem:[%s0 + $0x180] sm:$0xff]
    %v61 = vld [vmem:[%s0 + $0x188] sm:$0xff]
    %v62 = vld [vmem:[%s0 + $0x190] sm:$0xff]
    %v63 = vld [vmem:[%s0 + $0x198] sm:$0xff]
    %v64 = vld [vmem:[%s0 + $0x1a0] sm:$0xff]
    %v65 = vld [vmem:[%s0 + $0x1a8] sm:$0xff]
    %v66 = vld [vmem:[%s0 + $0x1b0] sm:$0xff]
    %v67 = vld [vmem:[%s0 + $0x1b8] sm:$0xff]
    %v68 = vld [vmem:[%s0 + $0x1c0] sm:$0xff]
    %v69 = vld [vmem:[%s0 + $0x1c8] sm:$0xff]
    %v70 = vld [vmem:[%s0 + $0x1d0] sm:$0xff]
    %v71 = vld [vmem:[%s0 + $0x1d8] sm:$0xff]
    %v72 = vld [vmem:[%s0 + $0x1e0] sm:$0xff]
    %v73 = vld [vmem:[%s0 + $0x1e8] sm:$0xff]
    %v74 = vld [vmem:[%s0 + $0x1f0] sm:$0xff]
    %v75 = vld [vmem:[%s0 + $0x1f8] sm:$0xff]
    %v76 = vld [vmem:[%s0 + $0x200] sm:$0xff]
    %v77 = vld [vmem:[%s0 + $0x208] sm:$0xff]
    %v78 = vld [vmem:[%s0 + $0x210] sm:$0xff]
    %v79 = vld [vmem:[%s0 + $0x218] sm:$0xff]
    %v80 = vld [vmem:[%s0 + $0x220] sm:$0xff]
    %v81 = vld [vmem:[%s0 + $0x228] sm:$0xff]
    %v82 = vld [vmem:[%s0 + $0x230] sm:$0xff]
    %v83 = vld [vmem:[%s0 + $0x238] sm:$0xff]
    %v84 = vld [vmem:[%s0 + $0x240] sm:$0xff]
    %v85 = vld [vmem:[%s0 + $0x248] sm:$0xff]
    %v86 = vld [vmem:[%s0 + $0x250] sm:$0xff]
    %v87 = vld [vmem:[%s0 + $0x258] sm:$0xff]
    %v88 = vld [vmem:[%s0 + $0x260] sm:$0xff]
    %v89 = vld [vmem:[%s0 + $0x268] sm:$0xff]
    %v90 = vld [vmem:[%s0 + $0x270] sm:$0xff]
    %v91 = vld [vmem:[%s0 + $0x278] sm:$0xff]
    %v92 = vld [vmem:[%s0 + $0x280] sm:$0xff]
    %v93 = vld [vmem:[%s0 + $0x288] sm:$0xff]
    %v94 = vld [vmem:[%s0 + $0x290] sm:$0xff]
    %v95 = vld [vmem:[%s0 + $0x298] sm:$0xff]
    %v96 = vld [vmem:[%s0 + $0x2a0] sm:$0xff]
    %v97 = vld [vmem:[%s0 + $0x2a8] sm:$0xff]
    %v98 = vld [vmem:[%s0 + $0x2b0] sm:$0xff]
    %v99 = vld [vmem:[%s0 + $0x2b8] sm:$0xff]
    %v100 = vld [vmem:[%s0 + $0x2c0] sm:$0xff]
    %v101 = vld [vmem:[%s0 + $0x2c8] sm:$0xff]
    %v102 = vld [vmem:[%s0 + $0x2d0] sm:$0xff]
    %v103 = vld [vmem:[%s0 + $0x2d8] sm:$0xff]
    %v104 = vld [vmem:[%s0 + $0x2e0] sm:$0xff]
    %v105 = vld [vmem:[%s0 + $0x2e8] sm:$0xff]
    %v106 = vld [vmem:[%s0 + $0x2f0] sm:$0xff]
    %v107 = vld [vmem:[%s0 + $0x2f8] sm:$0xff]
    %v108 = vld [vmem:[%s0 + $0x300] sm:$0xff]
    %v109 = vld [vmem:[%s0 + $0x308] sm:$0xff]
    %v110 = vld [vmem:[%s0 + $0x310] sm:$0xff]
    %v111 = vld [vmem:[%s0 + $0x318] sm:$0xff]
    %v112 = vld [vmem:[%s0 + $0x320] sm:$0xff]
    %v113 = vld [vmem:[%s0 + $0x328] sm:$0xff]
    %v114 = vld [vmem:[%s0 + $0x330] sm:$0xff]
    %v115 = vld [vmem:[%s0 + $0x338] sm:$0xff]
    %v116 = vld [vmem:[%s0 + $0x340] sm:$0xff]
    %v117 = vld [vmem:[%s0 + $0x348] sm:$0xff]
    %v118 = vld [vmem:[%s0 + $0x350] sm:$0xff]
    %v119 = vld [vmem:[%s0 + $0x358] sm:$0xff]
    %v120 = vld [vmem:[%s0 + $0x360] sm:$0xff]
    %v121 = vld [vmem:[%s0 + $0x368] sm:$0xff]
    %v122 = vld [vmem:[%s0 + $0x370] sm:$0xff]
    %v123 = vld [vmem:[%s0 + $0x378] sm:$0xff]
    %v124 = vld [vmem:[%s0 + $0x380] sm:$0xff]
    %v125 = vld [vmem:[%s0 + $0x388] sm:$0xff]
    %v126 = vld [vmem:[%s0 + $0x390] sm:$0xff]
    %v127 = vld [vmem:[%s0 + $0x398] sm:$0xff]
    %v128 = vld [vmem:[%s0 + $0x3a0] sm:$0xff]
    %v129 = vld [vmem:[%s0 + $0x3a8] sm:$0xff]
    %v130 = vld [vmem:[%s0 + $0x3b0] sm:$0xff]
    %v131 = vld [vmem:[%s0 + $0x3b8] sm:$0xff]
    %v132 = vld [vmem:[%s0 + $0x3c0] sm:$0xff]
    %v133 = vld [vmem:[%s0 + $0x3c8] sm:$0xff]
    %v134 = vld [vmem:[%s0 + $0x3d0] sm:$0xff]
    %v135 = vld [vmem:[%s0 + $0x3d8] sm:$0xff]
    %v136 = vld [vmem:[%s0 + $0x3e0] sm:$0xff]
    %v137 = vld [vmem:[%s0 + $0x3e8] sm:$0xff]
    %v138 = vld [vmem:[%s0 + $0x3f0] sm:$0xff]
    %v139 = vld [vmem:[%s0 + $0x3f8] sm:$0xff]
    %v140 = vld [vmem:[%s0 + $0x400] sm:$0xff]
    %v141 = vld [vmem:[%s0 + $0x408] sm:$0xff]
    %v142 = vld [vmem:[%s0 + $0x410] sm:$0xff]
    %v143 = vld [vmem:[%s0 + $0x418] sm:$0xff]
    %v144 = vld [vmem:[%s0 + $0x420] sm:$0xff]
    %v145 = vld [vmem:[%s0 + $0x428] sm:$0xff]
    %v146 = vld [vmem:[%s0 + $0x430] sm:$0xff]
    %v147 = vld [vmem:[%s0 + $0x438] sm:$0xff]
    %v148 = vld [vmem:[%s0 + $0x440] sm:$0xff]
    %v149 = vld [vmem:[%s0 + $0x448] sm:$0xff]
    %v150 = vld [vmem:[%s0 + $0x450] sm:$0xff]
    %v151 = vld [vmem:[%s0 + $0x458] sm:$0xff]
    %v152 = vld [vmem:[%s0 + $0x460] sm:$0xff]
    %v153 = vld [vmem:[%s0 + $0x468] sm:$0xff]
    %v154 = vld [vmem:[%s0 + $0x470] sm:$0xff]
    %v155 = vld [vmem:[%s0 + $0x478] sm:$0xff]
    %v156 = vld [vmem:[%s0 + $0x480] sm:$0xff]
    %v157 = vld [vmem:[%s0 + $0x488] sm:$0xff]
    %v158 = vld [vmem:[%s0 + $0x490] sm:$0xff]
    %v159 = vld [vmem:[%s0 + $0x498] sm:$0xff]
    %v160 = vld [vmem:[%s0 + $0x4a0] sm:$0xff]
    %v161 = vld [vmem:[%s0 + $0x4a8] sm:$0xff]
    %v162 = vld [vmem:[%s0 + $0x4b0] sm:$0xff]
    %v163 = vld [vmem:[%s0 + $0x4b8] sm:$0xff]
    %v164 = vld [vmem:[%s0 + $0x4c0] sm:$0xff]
    %v165 = vld [vmem:[%s0 + $0x4c8] sm:$0xff]
    %v166 = vld [vmem:[%s0 + $0x4d0] sm:$0xff]
    %v167 = vld [vmem:[%s0 + $0x4d8] sm:$0xff]
    %v168 = vld [vmem:[%s0 + $0x4e0] sm:$0xff]
    %v169 = vld [vmem:[%s0 + $0x4e8] sm:$0xff]
    %v170 = vld [vmem:[%s0 + $0x4f0] sm:$0xff]
    %v171 = vld [vmem:[%s0 + $0x4f8] sm:$0xff]
    %v172 = vld [vmem:[%s0 + $0x500] sm:$0xff]
    %v173 = vld [vmem:[%s0 + $0x508] sm:$0xff]
    %v174 = vld [vmem:[%s0 + $0x510] sm:$0xff]
    %v175 = vld [vmem:[%s0 + $0x518] sm:$0xff]
    %v176 = vld [vmem:[%s0 + $0x520] sm:$0xff]
    %v177 = vld [vmem:[%s0 + $0x528] sm:$0xff]
    %v178 = vld [vmem:[%s0 + $0x530] sm:$0xff]
    %v179 = vld [vmem:[%s0 + $0x538] sm:$0xff]
    %v180 = vld [vmem:[%s0 + $0x540] sm:$0xff]
    %v181 = vld [vmem:[%s0 + $0x548] sm:$0xff]
    %v182 = vld [vmem:[%s0 + $0x550] sm:$0xff]
    %v183 = vld [vmem:[%s0 + $0x558] sm:$0xff]
    %v184 = vld [vmem:[%s0 + $0x560] sm:$0xff]
    %v185 = vld [vmem:[%s0 + $0x568] sm:$0xff]
    %v186 = vld [vmem:[%s0 + $0x570] sm:$0xff]
    %v187 = vld [vmem:[%s0 + $0x578] sm:$0xff]
    %v188 = vld [vmem:[%s0 + $0x580] sm:$0xff]
    %v189 = vld [vmem:[%s0 + $0x588] sm:$0xff]
    %v190 = vld [vmem:[%s0 + $0x590] sm:$0xff]
    %v191 = vld [vmem:[%s0 + $0x598] sm:$0xff]
    %v192 = vld [vmem:[%s0 + $0x5a0] sm:$0xff]
    %v193 = vld [vmem:[%s0 + $0x5a8] sm:$0xff]
    %v194 = vld [vmem:[%s0 + $0x5b0] sm:$0xff]
    %v195 = vld [vmem:[%s0 + $0x5b8] sm:$0xff]
    %v196 = vld [vmem:[%s0 + $0x5c0] sm:$0xff]
    %v197 = vld [vmem:[%s0 + $0x5c8] sm:$0xff]
    %v198 = vld [vmem:[%s0 + $0x5d0] sm:$0xff]
    %v199 = vld [vmem:[%s0 + $0x5d8] sm:$0xff]
    %v200 = vld [vmem:[%s0 + $0x5e0] sm:$0xff]
    %v201 = vld [vmem:[%s0 + $0x5e8] sm:$0xff]
    %v202 = vld [vmem:[%s0 + $0x5f0] sm:$0xff]
    %v203 = vld [vmem:[%s0 + $0x5f8] sm:$0xff]
    %v204 = vld [vmem:[%s0 + $0x600] sm:$0xff]
    %v205 = vld [vmem:[%s0 + $0x608] sm:$0xff]
    %v206 = vld [vmem:[%s0 + $0x610] sm:$0xff]
    %v207 = vld [vmem:[%s0 + $0x618] sm:$0xff]
    %v208 = vld [vmem:[%s0 + $0x620] sm:$0xff]
    %v209 = vld [vmem:[%s0 + $0x628] sm:$0xff]
    %v210 = vld [vmem:[%s0 + $0x630] sm:$0xff]
    %v211 = vld [vmem:[%s0 + $0x638] sm:$0xff]
    %v212 = vld [vmem:[%s0 + $0x640] sm:$0xff]
    %v213 = vld [vmem:[%s0 + $0x648] sm:$0xff]
    %v214 = vld [vmem:[%s0 + $0x650] sm:$0xff]
    %v215 = vld [vmem:[%s0 + $0x658] sm:$0xff]
    %v216 = vld [vmem:[%s0 + $0x660] sm:$0xff]
    %v217 = vld [vmem:[%s0 + $0x668] sm:$0xff]
    %v218 = vld [vmem:[%s0 + $0x670] sm:$0xff]
    %v219 = vld [vmem:[%s0 + $0x678] sm:$0xff]
    %v220 = vld [vmem:[%s0 + $0x680] sm:$0xff]
    %v221 = vld [vmem:[%s0 + $0x688] sm:$0xff]
    %v222 = vld [vmem:[%s0 + $0x690] sm:$0xff]
    %v223 = vld [vmem:[%s0 + $0x698] sm:$0xff]
    %v224 = vld [vmem:[%s0 + $0x6a0] sm:$0xff]
    %v225 = vld [vmem:[%s0 + $0x6a8] sm:$0xff]
    %v226 = vld [vmem:[%s0 + $0x6b0] sm:$0xff]
    %v227 = vld [vmem:[%s0 + $0x6b8] sm:$0xff]
    %v228 = vld [vmem:[%s0 + $0x6c0] sm:$0xff]
    %v229 = vld [vmem:[%s0 + $0x6c8] sm:$0xff]
    %v230 = vld [vmem:[%s0 + $0x6d0] sm:$0xff]
    %v231 = vld [vmem:[%s0 + $0x6d8] sm:$0xff]
    %v232 = vld [vmem:[%s0 + $0x6e0] sm:$0xff]
    %v233 = vld [vmem:[%s0 + $0x6e8] sm:$0xff]
    %v234 = vld [vmem:[%s0 + $0x6f0] sm:$0xff]
    %v235 = vld [vmem:[%s0 + $0x6f8] sm:$0xff]
    %v236 = vld [vmem:[%s0 + $0x700] sm:$0xff]
    %v237 = vld [vmem:[%s0 + $0x708] sm:$0xff]
    %v238 = vld [vmem:[%s0 + $0x710] sm:$0xff]
    %v239 = vld [vmem:[%s0 + $0x718] sm:$0xff]
    %v240 = vld [vmem:[%s0 + $0x720] sm:$0xff]
    %v241 = vld [vmem:[%s0 + $0x728] sm:$0xff]
    %v242 = vld [vmem:[%s0 + $0x730] sm:$0xff]
    %v243 = vld [vmem:[%s0 + $0x738] sm:$0xff]
    %v244 = vld [vmem:[%s0 + $0x740] sm:$0xff]
    %v245 = vld [vmem:[%s0 + $0x748] sm:$0xff]
    %v246 = vld [vmem:[%s0 + $0x750] sm:$0xff]
    %v247 = vld [vmem:[%s0 + $0x758] sm:$0xff]
    %v248 = vld [vmem:[%s0 + $0x760] sm:$0xff]
    %v249 = vld [vmem:[%s0 + $0x768] sm:$0xff]
    %v250 = vld [vmem:[%s0 + $0x770] sm:$0xff]
    %v251 = vld [vmem:[%s0 + $0x778] sm:$0xff]
    %v252 = vld [vmem:[%s0 + $0x780] sm:$0xff]
    %v253 = vld [vmem:[%s0 + $0x788] sm:$0xff]
    %v254 = vld [vmem:[%s0 + $0x790] sm:$0xff]
    %v255 = vld [vmem:[%s0 + $0x798] sm:$0xff]
    %v256 = vld [vmem:[%s0 + $0x7a0] sm:$0xff]
    %v257 = vld [vmem:[%s0 + $0x7a8] sm:$0xff]
    %v258 = vld [vmem:[%s0 + $0x7b0] sm:$0xff]
    %v259 = vld [vmem:[%s0 + $0x7b8] sm:$0xff]
    %v260 = vld [vmem:[%s0 + $0x7c0] sm:$0xff]
    %v261 = vld [vmem:[%s0 + $0x7c8] sm:$0xff]
    %v262 = vld [vmem:[%s0 + $0x7d0] sm:$0xff]
    %v263 = vld [vmem:[%s0 + $0x7d8] sm:$0xff]
    %v264 = vld [vmem:[%s0 + $0x7e0] sm:$0xff]
    %v265 = vld [vmem:[%s0 + $0x7e8] sm:$0xff]
    %v266 = vld [vmem:[%s0 + $0x7f0] sm:$0xff]
    %v267 = vld [vmem:[%s0 + $0x7f8] sm:$0xff]
    %v268 = vadd.f32 %v12, %v28
    %v269 = vadd.f32 %v268, %v44
    %v270 = vadd.f32 %v269, %v60
    %v271 = vadd.f32 %v270, %v76
    %v272 = vadd.f32 %v271, %v92
    %v273 = vadd.f32 %v272, %v108
    %v274 = vadd.f32 %v273, %v124
    %v275 = vrot.slane %v274, 4
    %v276 = vadd.f32 %v274, %v275
    %v277 = vrot.slane %v276, 2
    %v278 = vadd.f32 %v276, %v277
    %v279 = vrot.slane %v278, 1
    %v280 = vadd.f32 %v278, %v279
    %v281 = vadd.f32 %v13, %v29
    %v282 = vadd.f32 %v281, %v45
    %v283 = vadd.f32 %v282, %v61
    %v284 = vadd.f32 %v283, %v77
    %v285 = vadd.f32 %v284, %v93
    %v286 = vadd.f32 %v285, %v109
    %v287 = vadd.f32 %v286, %v125
    %v288 = vrot.slane %v287, 4
    %v289 = vadd.f32 %v287, %v288
    %v290 = vrot.slane %v289, 2
    %v291 = vadd.f32 %v289, %v290
    %v292 = vrot.slane %v291, 1
    %v293 = vadd.f32 %v291, %v292
    %v294 = vadd.f32 %v14, %v30
    %v295 = vadd.f32 %v294, %v46
    %v296 = vadd.f32 %v295, %v62
    %v297 = vadd.f32 %v296, %v78
    %v298 = vadd.f32 %v297, %v94
    %v299 = vadd.f32 %v298, %v110
    %v300 = vadd.f32 %v299, %v126
    %v301 = vrot.slane %v300, 4
    %v302 = vadd.f32 %v300, %v301
    %v303 = vrot.slane %v302, 2
    %v304 = vadd.f32 %v302, %v303
    %v305 = vrot.slane %v304, 1
    %v306 = vadd.f32 %v304, %v305
    %v307 = vadd.f32 %v15, %v31
    %v308 = vadd.f32 %v307, %v47
    %v309 = vadd.f32 %v308, %v63
    %v310 = vadd.f32 %v309, %v79
    %v311 = vadd.f32 %v310, %v95
    %v312 = vadd.f32 %v311, %v111
    %v313 = vadd.f32 %v312, %v127
    %v314 = vrot.slane %v313, 4
    %v315 = vadd.f32 %v313, %v314
    %v316 = vrot.slane %v315, 2
    %v317 = vadd.f32 %v315, %v316
    %v318 = vrot.slane %v317, 1
    %v319 = vadd.f32 %v317, %v318
    %v320 = vadd.f32 %v16, %v32
    %v321 = vadd.f32 %v320, %v48
    %v322 = vadd.f32 %v321, %v64
    %v323 = vadd.f32 %v322, %v80
    %v324 = vadd.f32 %v323, %v96
    %v325 = vadd.f32 %v324, %v112
    %v326 = vadd.f32 %v325, %v128
    %v327 = vrot.slane %v326, 4
    %v328 = vadd.f32 %v326, %v327
    %v329 = vrot.slane %v328, 2
    %v330 = vadd.f32 %v328, %v329
    %v331 = vrot.slane %v330, 1
    %v332 = vadd.f32 %v330, %v331
    %v333 = vadd.f32 %v17, %v33
    %v334 = vadd.f32 %v333, %v49
    %v335 = vadd.f32 %v334, %v65
    %v336 = vadd.f32 %v335, %v81
    %v337 = vadd.f32 %v336, %v97
    %v338 = vadd.f32 %v337, %v113
    %v339 = vadd.f32 %v338, %v129
    %v340 = vrot.slane %v339, 4
    %v341 = vadd.f32 %v339, %v340
    %v342 = vrot.slane %v341, 2
    %v343 = vadd.f32 %v341, %v342
    %v344 = vrot.slane %v343, 1
    %v345 = vadd.f32 %v343, %v344
    %v346 = vadd.f32 %v18, %v34
    %v347 = vadd.f32 %v346, %v50
    %v348 = vadd.f32 %v347, %v66
    %v349 = vadd.f32 %v348, %v82
    %v350 = vadd.f32 %v349, %v98
    %v351 = vadd.f32 %v350, %v114
    %v352 = vadd.f32 %v351, %v130
    %v353 = vrot.slane %v352, 4
    %v354 = vadd.f32 %v352, %v353
    %v355 = vrot.slane %v354, 2
    %v356 = vadd.f32 %v354, %v355
    %v357 = vrot.slane %v356, 1
    %v358 = vadd.f32 %v356, %v357
    %v359 = vadd.f32 %v19, %v35
    %v360 = vadd.f32 %v359, %v51
    %v361 = vadd.f32 %v360, %v67
    %v362 = vadd.f32 %v361, %v83
    %v363 = vadd.f32 %v362, %v99
    %v364 = vadd.f32 %v363, %v115
    %v365 = vadd.f32 %v364, %v131
    %v366 = vrot.slane %v365, 4
    %v367 = vadd.f32 %v365, %v366
    %v368 = vrot.slane %v367, 2
    %v369 = vadd.f32 %v367, %v368
    %v370 = vrot.slane %v369, 1
    %v371 = vadd.f32 %v369, %v370
    %v372 = vadd.f32 %v20, %v36
    %v373 = vadd.f32 %v372, %v52
    %v374 = vadd.f32 %v373, %v68
    %v375 = vadd.f32 %v374, %v84
    %v376 = vadd.f32 %v375, %v100
    %v377 = vadd.f32 %v376, %v116
    %v378 = vadd.f32 %v377, %v132
    %v379 = vrot.slane %v378, 4
    %v380 = vadd.f32 %v378, %v379
    %v381 = vrot.slane %v380, 2
    %v382 = vadd.f32 %v380, %v381
    %v383 = vrot.slane %v382, 1
    %v384 = vadd.f32 %v382, %v383
    %v385 = vadd.f32 %v21, %v37
    %v386 = vadd.f32 %v385, %v53
    %v387 = vadd.f32 %v386, %v69
    %v388 = vadd.f32 %v387, %v85
    %v389 = vadd.f32 %v388, %v101
    %v390 = vadd.f32 %v389, %v117
    %v391 = vadd.f32 %v390, %v133
    %v392 = vrot.slane %v391, 4
    %v393 = vadd.f32 %v391, %v392
    %v394 = vrot.slane %v393, 2
    %v395 = vadd.f32 %v393, %v394
    %v396 = vrot.slane %v395, 1
    %v397 = vadd.f32 %v395, %v396
    %v398 = vadd.f32 %v22, %v38
    %v399 = vadd.f32 %v398, %v54
    %v400 = vadd.f32 %v399, %v70
    %v401 = vadd.f32 %v400, %v86
    %v402 = vadd.f32 %v401, %v102
    %v403 = vadd.f32 %v402, %v118
    %v404 = vadd.f32 %v403, %v134
    %v405 = vrot.slane %v404, 4
    %v406 = vadd.f32 %v404, %v405
    %v407 = vrot.slane %v406, 2
    %v408 = vadd.f32 %v406, %v407
    %v409 = vrot.slane %v408, 1
    %v410 = vadd.f32 %v408, %v409
    %v411 = vadd.f32 %v23, %v39
    %v412 = vadd.f32 %v411, %v55
    %v413 = vadd.f32 %v412, %v71
    %v414 = vadd.f32 %v413, %v87
    %v415 = vadd.f32 %v414, %v103
    %v416 = vadd.f32 %v415, %v119
    %v417 = vadd.f32 %v416, %v135
    %v418 = vrot.slane %v417, 4
    %v419 = vadd.f32 %v417, %v418
    %v420 = vrot.slane %v419, 2
    %v421 = vadd.f32 %v419, %v420
    %v422 = vrot.slane %v421, 1
    %v423 = vadd.f32 %v421, %v422
    %v424 = vadd.f32 %v24, %v40
    %v425 = vadd.f32 %v424, %v56
    %v426 = vadd.f32 %v425, %v72
    %v427 = vadd.f32 %v426, %v88
    %v428 = vadd.f32 %v427, %v104
    %v429 = vadd.f32 %v428, %v120
    %v430 = vadd.f32 %v429, %v136
    %v431 = vrot.slane %v430, 4
    %v432 = vadd.f32 %v430, %v431
    %v433 = vrot.slane %v432, 2
    %v434 = vadd.f32 %v432, %v433
    %v435 = vrot.slane %v434, 1
    %v436 = vadd.f32 %v434, %v435
    %v437 = vadd.f32 %v25, %v41
    %v438 = vadd.f32 %v437, %v57
    %v439 = vadd.f32 %v438, %v73
    %v440 = vadd.f32 %v439, %v89
    %v441 = vadd.f32 %v440, %v105
    %v442 = vadd.f32 %v441, %v121
    %v443 = vadd.f32 %v442, %v137
    %v444 = vrot.slane %v443, 4
    %v445 = vadd.f32 %v443, %v444
    %v446 = vrot.slane %v445, 2
    %v447 = vadd.f32 %v445, %v446
    %v448 = vrot.slane %v447, 1
    %v449 = vadd.f32 %v447, %v448
    %v450 = vadd.f32 %v26, %v42
    %v451 = vadd.f32 %v450, %v58
    %v452 = vadd.f32 %v451, %v74
    %v453 = vadd.f32 %v452, %v90
    %v454 = vadd.f32 %v453, %v106
    %v455 = vadd.f32 %v454, %v122
    %v456 = vadd.f32 %v455, %v138
    %v457 = vrot.slane %v456, 4
    %v458 = vadd.f32 %v456, %v457
    %v459 = vrot.slane %v458, 2
    %v460 = vadd.f32 %v458, %v459
    %v461 = vrot.slane %v460, 1
    %v462 = vadd.f32 %v460, %v461
    %v463 = vadd.f32 %v27, %v43
    %v464 = vadd.f32 %v463, %v59
    %v465 = vadd.f32 %v464, %v75
    %v466 = vadd.f32 %v465, %v91
    %v467 = vadd.f32 %v466, %v107
    %v468 = vadd.f32 %v467, %v123
    %v469 = vadd.f32 %v468, %v139
    %v470 = vrot.slane %v469, 4
    %v471 = vadd.f32 %v469, %v470
    %v472 = vrot.slane %v471, 2
    %v473 = vadd.f32 %v471, %v472
    %v474 = vrot.slane %v473, 1
    %v475 = vadd.f32 %v473, %v474
    %v476 = vadd.f32 %v140, %v156
    %v477 = vadd.f32 %v476, %v172
    %v478 = vadd.f32 %v477, %v188
    %v479 = vadd.f32 %v478, %v204
    %v480 = vadd.f32 %v479, %v220
    %v481 = vadd.f32 %v480, %v236
    %v482 = vadd.f32 %v481, %v252
    %v483 = vrot.slane %v482, 4
    %v484 = vadd.f32 %v482, %v483
    %v485 = vrot.slane %v484, 2
    %v486 = vadd.f32 %v484, %v485
    %v487 = vrot.slane %v486, 1
    %v488 = vadd.f32 %v486, %v487
    %v489 = vadd.f32 %v141, %v157
    %v490 = vadd.f32 %v489, %v173
    %v491 = vadd.f32 %v490, %v189
    %v492 = vadd.f32 %v491, %v205
    %v493 = vadd.f32 %v492, %v221
    %v494 = vadd.f32 %v493, %v237
    %v495 = vadd.f32 %v494, %v253
    %v496 = vrot.slane %v495, 4
    %v497 = vadd.f32 %v495, %v496
    %v498 = vrot.slane %v497, 2
    %v499 = vadd.f32 %v497, %v498
    %v500 = vrot.slane %v499, 1
    %v501 = vadd.f32 %v499, %v500
    %v502 = vadd.f32 %v142, %v158
    %v503 = vadd.f32 %v502, %v174
    %v504 = vadd.f32 %v503, %v190
    %v505 = vadd.f32 %v504, %v206
    %v506 = vadd.f32 %v505, %v222
    %v507 = vadd.f32 %v506, %v238
    %v508 = vadd.f32 %v507, %v254
    %v509 = vrot.slane %v508, 4
    %v510 = vadd.f32 %v508, %v509
    %v511 = vrot.slane %v510, 2
    %v512 = vadd.f32 %v510, %v511
    %v513 = vrot.slane %v512, 1
    %v514 = vadd.f32 %v512, %v513
    %v515 = vadd.f32 %v143, %v159
    %v516 = vadd.f32 %v515, %v175
    %v517 = vadd.f32 %v516, %v191
    %v518 = vadd.f32 %v517, %v207
    %v519 = vadd.f32 %v518, %v223
    %v520 = vadd.f32 %v519, %v239
    %v521 = vadd.f32 %v520, %v255
    %v522 = vrot.slane %v521, 4
    %v523 = vadd.f32 %v521, %v522
    %v524 = vrot.slane %v523, 2
    %v525 = vadd.f32 %v523, %v524
    %v526 = vrot.slane %v525, 1
    %v527 = vadd.f32 %v525, %v526
    %v528 = vadd.f32 %v144, %v160
    %v529 = vadd.f32 %v528, %v176
    %v530 = vadd.f32 %v529, %v192
    %v531 = vadd.f32 %v530, %v208
    %v532 = vadd.f32 %v531, %v224
    %v533 = vadd.f32 %v532, %v240
    %v534 = vadd.f32 %v533, %v256
    %v535 = vrot.slane %v534, 4
    %v536 = vadd.f32 %v534, %v535
    %v537 = vrot.slane %v536, 2
    %v538 = vadd.f32 %v536, %v537
    %v539 = vrot.slane %v538, 1
    %v540 = vadd.f32 %v538, %v539
    %v541 = vadd.f32 %v145, %v161
    %v542 = vadd.f32 %v541, %v177
    %v543 = vadd.f32 %v542, %v193
    %v544 = vadd.f32 %v543, %v209
    %v545 = vadd.f32 %v544, %v225
    %v546 = vadd.f32 %v545, %v241
    %v547 = vadd.f32 %v546, %v257
    %v548 = vrot.slane %v547, 4
    %v549 = vadd.f32 %v547, %v548
    %v550 = vrot.slane %v549, 2
    %v551 = vadd.f32 %v549, %v550
    %v552 = vrot.slane %v551, 1
    %v553 = vadd.f32 %v551, %v552
    %v554 = vadd.f32 %v146, %v162
    %v555 = vadd.f32 %v554, %v178
    %v556 = vadd.f32 %v555, %v194
    %v557 = vadd.f32 %v556, %v210
    %v558 = vadd.f32 %v557, %v226
    %v559 = vadd.f32 %v558, %v242
    %v560 = vadd.f32 %v559, %v258
    %v561 = vrot.slane %v560, 4
    %v562 = vadd.f32 %v560, %v561
    %v563 = vrot.slane %v562, 2
    %v564 = vadd.f32 %v562, %v563
    %v565 = vrot.slane %v564, 1
    %v566 = vadd.f32 %v564, %v565
    %v567 = vadd.f32 %v147, %v163
    %v568 = vadd.f32 %v567, %v179
    %v569 = vadd.f32 %v568, %v195
    %v570 = vadd.f32 %v569, %v211
    %v571 = vadd.f32 %v570, %v227
    %v572 = vadd.f32 %v571, %v243
    %v573 = vadd.f32 %v572, %v259
    %v574 = vrot.slane %v573, 4
    %v575 = vadd.f32 %v573, %v574
    %v576 = vrot.slane %v575, 2
    %v577 = vadd.f32 %v575, %v576
    %v578 = vrot.slane %v577, 1
    %v579 = vadd.f32 %v577, %v578
    %v580 = vadd.f32 %v148, %v164
    %v581 = vadd.f32 %v580, %v180
    %v582 = vadd.f32 %v581, %v196
    %v583 = vadd.f32 %v582, %v212
    %v584 = vadd.f32 %v583, %v228
    %v585 = vadd.f32 %v584, %v244
    %v586 = vadd.f32 %v585, %v260
    %v587 = vrot.slane %v586, 4
    %v588 = vadd.f32 %v586, %v587
    %v589 = vrot.slane %v588, 2
    %v590 = vadd.f32 %v588, %v589
    %v591 = vrot.slane %v590, 1
    %v592 = vadd.f32 %v590, %v591
    %v593 = vadd.f32 %v149, %v165
    %v594 = vadd.f32 %v593, %v181
    %v595 = vadd.f32 %v594, %v197
    %v596 = vadd.f32 %v595, %v213
    %v597 = vadd.f32 %v596, %v229
    %v598 = vadd.f32 %v597, %v245
    %v599 = vadd.f32 %v598, %v261
    %v600 = vrot.slane %v599, 4
    %v601 = vadd.f32 %v599, %v600
    %v602 = vrot.slane %v601, 2
    %v603 = vadd.f32 %v601, %v602
    %v604 = vrot.slane %v603, 1
    %v605 = vadd.f32 %v603, %v604
    %v606 = vadd.f32 %v150, %v166
    %v607 = vadd.f32 %v606, %v182
    %v608 = vadd.f32 %v607, %v198
    %v609 = vadd.f32 %v608, %v214
    %v610 = vadd.f32 %v609, %v230
    %v611 = vadd.f32 %v610, %v246
    %v612 = vadd.f32 %v611, %v262
    %v613 = vrot.slane %v612, 4
    %v614 = vadd.f32 %v612, %v613
    %v615 = vrot.slane %v614, 2
    %v616 = vadd.f32 %v614, %v615
    %v617 = vrot.slane %v616, 1
    %v618 = vadd.f32 %v616, %v617
    %v619 = vadd.f32 %v151, %v167
    %v620 = vadd.f32 %v619, %v183
    %v621 = vadd.f32 %v620, %v199
    %v622 = vadd.f32 %v621, %v215
    %v623 = vadd.f32 %v622, %v231
    %v624 = vadd.f32 %v623, %v247
    %v625 = vadd.f32 %v624, %v263
    %v626 = vrot.slane %v625, 4
    %v627 = vadd.f32 %v625, %v626
    %v628 = vrot.slane %v627, 2
    %v629 = vadd.f32 %v627, %v628
    %v630 = vrot.slane %v629, 1
    %v631 = vadd.f32 %v629, %v630
    %v632 = vadd.f32 %v152, %v168
    %v633 = vadd.f32 %v632, %v184
    %v634 = vadd.f32 %v633, %v200
    %v635 = vadd.f32 %v634, %v216
    %v636 = vadd.f32 %v635, %v232
    %v637 = vadd.f32 %v636, %v248
    %v638 = vadd.f32 %v637, %v264
    %v639 = vrot.slane %v638, 4
    %v640 = vadd.f32 %v638, %v639
    %v641 = vrot.slane %v640, 2
    %v642 = vadd.f32 %v640, %v641
    %v643 = vrot.slane %v642, 1
    %v644 = vadd.f32 %v642, %v643
    %v645 = vadd.f32 %v153, %v169
    %v646 = vadd.f32 %v645, %v185
    %v647 = vadd.f32 %v646, %v201
    %v648 = vadd.f32 %v647, %v217
    %v649 = vadd.f32 %v648, %v233
    %v650 = vadd.f32 %v649, %v249
    %v651 = vadd.f32 %v650, %v265
    %v652 = vrot.slane %v651, 4
    %v653 = vadd.f32 %v651, %v652
    %v654 = vrot.slane %v653, 2
    %v655 = vadd.f32 %v653, %v654
    %v656 = vrot.slane %v655, 1
    %v657 = vadd.f32 %v655, %v656
    %v658 = vadd.f32 %v154, %v170
    %v659 = vadd.f32 %v658, %v186
    %v660 = vadd.f32 %v659, %v202
    %v661 = vadd.f32 %v660, %v218
    %v662 = vadd.f32 %v661, %v234
    %v663 = vadd.f32 %v662, %v250
    %v664 = vadd.f32 %v663, %v266
    %v665 = vrot.slane %v664, 4
    %v666 = vadd.f32 %v664, %v665
    %v667 = vrot.slane %v666, 2
    %v668 = vadd.f32 %v666, %v667
    %v669 = vrot.slane %v668, 1
    %v670 = vadd.f32 %v668, %v669
    %v671 = vadd.f32 %v155, %v171
    %v672 = vadd.f32 %v671, %v187
    %v673 = vadd.f32 %v672, %v203
    %v674 = vadd.f32 %v673, %v219
    %v675 = vadd.f32 %v674, %v235
    %v676 = vadd.f32 %v675, %v251
    %v677 = vadd.f32 %v676, %v267
    %v678 = vrot.slane %v677, 4
    %v679 = vadd.f32 %v677, %v678
    %v680 = vrot.slane %v679, 2
    %v681 = vadd.f32 %v679, %v680
    %v682 = vrot.slane %v681, 1
    %v683 = vadd.f32 %v681, %v682
    %v684 = vld [vmem:[%s1] sm:$0xff]
    %v685 = vld [vmem:[%s1 + $0x8] sm:$0xff]
    %v686 = vld [vmem:[%s1 + $0x10] sm:$0xff]
    %v687 = vld [vmem:[%s1 + $0x18] sm:$0xff]
    %v688 = vld [vmem:[%s1 + $0x20] sm:$0xff]
    %v689 = vld [vmem:[%s1 + $0x28] sm:$0xff]
    %v690 = vld [vmem:[%s1 + $0x30] sm:$0xff]
    %v691 = vld [vmem:[%s1 + $0x38] sm:$0xff]
    %v692 = vld [vmem:[%s1 + $0x40] sm:$0xff]
    %v693 = vld [vmem:[%s1 + $0x48] sm:$0xff]
    %v694 = vld [vmem:[%s1 + $0x50] sm:$0xff]
    %v695 = vld [vmem:[%s1 + $0x58] sm:$0xff]
    %v696 = vld [vmem:[%s1 + $0x60] sm:$0xff]
    %v697 = vld [vmem:[%s1 + $0x68] sm:$0xff]
    %v698 = vld [vmem:[%s1 + $0x70] sm:$0xff]
    %v699 = vld [vmem:[%s1 + $0x78] sm:$0xff]
    %v700 = vld [vmem:[%s1 + $0x80] sm:$0xff]
    %v701 = vld [vmem:[%s1 + $0x88] sm:$0xff]
    %v702 = vld [vmem:[%s1 + $0x90] sm:$0xff]
    %v703 = vld [vmem:[%s1 + $0x98] sm:$0xff]
    %v704 = vld [vmem:[%s1 + $0xa0] sm:$0xff]
    %v705 = vld [vmem:[%s1 + $0xa8] sm:$0xff]
    %v706 = vld [vmem:[%s1 + $0xb0] sm:$0xff]
    %v707 = vld [vmem:[%s1 + $0xb8] sm:$0xff]
    %v708 = vld [vmem:[%s1 + $0xc0] sm:$0xff]
    %v709 = vld [vmem:[%s1 + $0xc8] sm:$0xff]
    %v710 = vld [vmem:[%s1 + $0xd0] sm:$0xff]
    %v711 = vld [vmem:[%s1 + $0xd8] sm:$0xff]
    %v712 = vld [vmem:[%s1 + $0xe0] sm:$0xff]
    %v713 = vld [vmem:[%s1 + $0xe8] sm:$0xff]
    %v714 = vld [vmem:[%s1 + $0xf0] sm:$0xff]
    %v715 = vld [vmem:[%s1 + $0xf8] sm:$0xff]
    %v716 = vld [vmem:[%s1 + $0x100] sm:$0xff]
    %v717 = vld [vmem:[%s1 + $0x108] sm:$0xff]
    %v718 = vld [vmem:[%s1 + $0x110] sm:$0xff]
    %v719 = vld [vmem:[%s1 + $0x118] sm:$0xff]
    %v720 = vld [vmem:[%s1 + $0x120] sm:$0xff]
    %v721 = vld [vmem:[%s1 + $0x128] sm:$0xff]
    %v722 = vld [vmem:[%s1 + $0x130] sm:$0xff]
    %v723 = vld [vmem:[%s1 + $0x138] sm:$0xff]
    %v724 = vld [vmem:[%s1 + $0x140] sm:$0xff]
    %v725 = vld [vmem:[%s1 + $0x148] sm:$0xff]
    %v726 = vld [vmem:[%s1 + $0x150] sm:$0xff]
    %v727 = vld [vmem:[%s1 + $0x158] sm:$0xff]
    %v728 = vld [vmem:[%s1 + $0x160] sm:$0xff]
    %v729 = vld [vmem:[%s1 + $0x168] sm:$0xff]
    %v730 = vld [vmem:[%s1 + $0x170] sm:$0xff]
    %v731 = vld [vmem:[%s1 + $0x178] sm:$0xff]
    %v732 = vld [vmem:[%s1 + $0x180] sm:$0xff]
    %v733 = vld [vmem:[%s1 + $0x188] sm:$0xff]
    %v734 = vld [vmem:[%s1 + $0x190] sm:$0xff]
    %v735 = vld [vmem:[%s1 + $0x198] sm:$0xff]
    %v736 = vld [vmem:[%s1 + $0x1a0] sm:$0xff]
    %v737 = vld [vmem:[%s1 + $0x1a8] sm:$0xff]
    %v738 = vld [vmem:[%s1 + $0x1b0] sm:$0xff]
    %v739 = vld [vmem:[%s1 + $0x1b8] sm:$0xff]
    %v740 = vld [vmem:[%s1 + $0x1c0] sm:$0xff]
    %v741 = vld [vmem:[%s1 + $0x1c8] sm:$0xff]
    %v742 = vld [vmem:[%s1 + $0x1d0] sm:$0xff]
    %v743 = vld [vmem:[%s1 + $0x1d8] sm:$0xff]
    %v744 = vld [vmem:[%s1 + $0x1e0] sm:$0xff]
    %v745 = vld [vmem:[%s1 + $0x1e8] sm:$0xff]
    %v746 = vld [vmem:[%s1 + $0x1f0] sm:$0xff]
    %v747 = vld [vmem:[%s1 + $0x1f8] sm:$0xff]
    %v748 = vld [vmem:[%s1 + $0x200] sm:$0xff]
    %v749 = vld [vmem:[%s1 + $0x208] sm:$0xff]
    %v750 = vld [vmem:[%s1 + $0x210] sm:$0xff]
    %v751 = vld [vmem:[%s1 + $0x218] sm:$0xff]
    %v752 = vld [vmem:[%s1 + $0x220] sm:$0xff]
    %v753 = vld [vmem:[%s1 + $0x228] sm:$0xff]
    %v754 = vld [vmem:[%s1 + $0x230] sm:$0xff]
    %v755 = vld [vmem:[%s1 + $0x238] sm:$0xff]
    %v756 = vld [vmem:[%s1 + $0x240] sm:$0xff]
    %v757 = vld [vmem:[%s1 + $0x248] sm:$0xff]
    %v758 = vld [vmem:[%s1 + $0x250] sm:$0xff]
    %v759 = vld [vmem:[%s1 + $0x258] sm:$0xff]
    %v760 = vld [vmem:[%s1 + $0x260] sm:$0xff]
    %v761 = vld [vmem:[%s1 + $0x268] sm:$0xff]
    %v762 = vld [vmem:[%s1 + $0x270] sm:$0xff]
    %v763 = vld [vmem:[%s1 + $0x278] sm:$0xff]
    %v764 = vld [vmem:[%s1 + $0x280] sm:$0xff]
    %v765 = vld [vmem:[%s1 + $0x288] sm:$0xff]
    %v766 = vld [vmem:[%s1 + $0x290] sm:$0xff]
    %v767 = vld [vmem:[%s1 + $0x298] sm:$0xff]
    %v768 = vld [vmem:[%s1 + $0x2a0] sm:$0xff]
    %v769 = vld [vmem:[%s1 + $0x2a8] sm:$0xff]
    %v770 = vld [vmem:[%s1 + $0x2b0] sm:$0xff]
    %v771 = vld [vmem:[%s1 + $0x2b8] sm:$0xff]
    %v772 = vld [vmem:[%s1 + $0x2c0] sm:$0xff]
    %v773 = vld [vmem:[%s1 + $0x2c8] sm:$0xff]
    %v774 = vld [vmem:[%s1 + $0x2d0] sm:$0xff]
    %v775 = vld [vmem:[%s1 + $0x2d8] sm:$0xff]
    %v776 = vld [vmem:[%s1 + $0x2e0] sm:$0xff]
    %v777 = vld [vmem:[%s1 + $0x2e8] sm:$0xff]
    %v778 = vld [vmem:[%s1 + $0x2f0] sm:$0xff]
    %v779 = vld [vmem:[%s1 + $0x2f8] sm:$0xff]
    %v780 = vld [vmem:[%s1 + $0x300] sm:$0xff]
    %v781 = vld [vmem:[%s1 + $0x308] sm:$0xff]
    %v782 = vld [vmem:[%s1 + $0x310] sm:$0xff]
    %v783 = vld [vmem:[%s1 + $0x318] sm:$0xff]
    %v784 = vld [vmem:[%s1 + $0x320] sm:$0xff]
    %v785 = vld [vmem:[%s1 + $0x328] sm:$0xff]
    %v786 = vld [vmem:[%s1 + $0x330] sm:$0xff]
    %v787 = vld [vmem:[%s1 + $0x338] sm:$0xff]
    %v788 = vld [vmem:[%s1 + $0x340] sm:$0xff]
    %v789 = vld [vmem:[%s1 + $0x348] sm:$0xff]
    %v790 = vld [vmem:[%s1 + $0x350] sm:$0xff]
    %v791 = vld [vmem:[%s1 + $0x358] sm:$0xff]
    %v792 = vld [vmem:[%s1 + $0x360] sm:$0xff]
    %v793 = vld [vmem:[%s1 + $0x368] sm:$0xff]
    %v794 = vld [vmem:[%s1 + $0x370] sm:$0xff]
    %v795 = vld [vmem:[%s1 + $0x378] sm:$0xff]
    %v796 = vld [vmem:[%s1 + $0x380] sm:$0xff]
    %v797 = vld [vmem:[%s1 + $0x388] sm:$0xff]
    %v798 = vld [vmem:[%s1 + $0x390] sm:$0xff]
    %v799 = vld [vmem:[%s1 + $0x398] sm:$0xff]
    %v800 = vld [vmem:[%s1 + $0x3a0] sm:$0xff]
    %v801 = vld [vmem:[%s1 + $0x3a8] sm:$0xff]
    %v802 = vld [vmem:[%s1 + $0x3b0] sm:$0xff]
    %v803 = vld [vmem:[%s1 + $0x3b8] sm:$0xff]
    %v804 = vld [vmem:[%s1 + $0x3c0] sm:$0xff]
    %v805 = vld [vmem:[%s1 + $0x3c8] sm:$0xff]
    %v806 = vld [vmem:[%s1 + $0x3d0] sm:$0xff]
    %v807 = vld [vmem:[%s1 + $0x3d8] sm:$0xff]
    %v808 = vld [vmem:[%s1 + $0x3e0] sm:$0xff]
    %v809 = vld [vmem:[%s1 + $0x3e8] sm:$0xff]
    %v810 = vld [vmem:[%s1 + $0x3f0] sm:$0xff]
    %v811 = vld [vmem:[%s1 + $0x3f8] sm:$0xff]
    %v812 = vld [vmem:[%s1 + $0x400] sm:$0xff]
    %v813 = vld [vmem:[%s1 + $0x408] sm:$0xff]
    %v814 = vld [vmem:[%s1 + $0x410] sm:$0xff]
    %v815 = vld [vmem:[%s1 + $0x418] sm:$0xff]
    %v816 = vld [vmem:[%s1 + $0x420] sm:$0xff]
    %v817 = vld [vmem:[%s1 + $0x428] sm:$0xff]
    %v818 = vld [vmem:[%s1 + $0x430] sm:$0xff]
    %v819 = vld [vmem:[%s1 + $0x438] sm:$0xff]
    %v820 = vld [vmem:[%s1 + $0x440] sm:$0xff]
    %v821 = vld [vmem:[%s1 + $0x448] sm:$0xff]
    %v822 = vld [vmem:[%s1 + $0x450] sm:$0xff]
    %v823 = vld [vmem:[%s1 + $0x458] sm:$0xff]
    %v824 = vld [vmem:[%s1 + $0x460] sm:$0xff]
    %v825 = vld [vmem:[%s1 + $0x468] sm:$0xff]
    %v826 = vld [vmem:[%s1 + $0x470] sm:$0xff]
    %v827 = vld [vmem:[%s1 + $0x478] sm:$0xff]
    %v828 = vld [vmem:[%s1 + $0x480] sm:$0xff]
    %v829 = vld [vmem:[%s1 + $0x488] sm:$0xff]
    %v830 = vld [vmem:[%s1 + $0x490] sm:$0xff]
    %v831 = vld [vmem:[%s1 + $0x498] sm:$0xff]
    %v832 = vld [vmem:[%s1 + $0x4a0] sm:$0xff]
    %v833 = vld [vmem:[%s1 + $0x4a8] sm:$0xff]
    %v834 = vld [vmem:[%s1 + $0x4b0] sm:$0xff]
    %v835 = vld [vmem:[%s1 + $0x4b8] sm:$0xff]
    %v836 = vld [vmem:[%s1 + $0x4c0] sm:$0xff]
    %v837 = vld [vmem:[%s1 + $0x4c8] sm:$0xff]
    %v838 = vld [vmem:[%s1 + $0x4d0] sm:$0xff]
    %v839 = vld [vmem:[%s1 + $0x4d8] sm:$0xff]
    %v840 = vld [vmem:[%s1 + $0x4e0] sm:$0xff]
    %v841 = vld [vmem:[%s1 + $0x4e8] sm:$0xff]
    %v842 = vld [vmem:[%s1 + $0x4f0] sm:$0xff]
    %v843 = vld [vmem:[%s1 + $0x4f8] sm:$0xff]
    %v844 = vld [vmem:[%s1 + $0x500] sm:$0xff]
    %v845 = vld [vmem:[%s1 + $0x508] sm:$0xff]
    %v846 = vld [vmem:[%s1 + $0x510] sm:$0xff]
    %v847 = vld [vmem:[%s1 + $0x518] sm:$0xff]
    %v848 = vld [vmem:[%s1 + $0x520] sm:$0xff]
    %v849 = vld [vmem:[%s1 + $0x528] sm:$0xff]
    %v850 = vld [vmem:[%s1 + $0x530] sm:$0xff]
    %v851 = vld [vmem:[%s1 + $0x538] sm:$0xff]
    %v852 = vld [vmem:[%s1 + $0x540] sm:$0xff]
    %v853 = vld [vmem:[%s1 + $0x548] sm:$0xff]
    %v854 = vld [vmem:[%s1 + $0x550] sm:$0xff]
    %v855 = vld [vmem:[%s1 + $0x558] sm:$0xff]
    %v856 = vld [vmem:[%s1 + $0x560] sm:$0xff]
    %v857 = vld [vmem:[%s1 + $0x568] sm:$0xff]
    %v858 = vld [vmem:[%s1 + $0x570] sm:$0xff]
    %v859 = vld [vmem:[%s1 + $0x578] sm:$0xff]
    %v860 = vld [vmem:[%s1 + $0x580] sm:$0xff]
    %v861 = vld [vmem:[%s1 + $0x588] sm:$0xff]
    %v862 = vld [vmem:[%s1 + $0x590] sm:$0xff]
    %v863 = vld [vmem:[%s1 + $0x598] sm:$0xff]
    %v864 = vld [vmem:[%s1 + $0x5a0] sm:$0xff]
    %v865 = vld [vmem:[%s1 + $0x5a8] sm:$0xff]
    %v866 = vld [vmem:[%s1 + $0x5b0] sm:$0xff]
    %v867 = vld [vmem:[%s1 + $0x5b8] sm:$0xff]
    %v868 = vld [vmem:[%s1 + $0x5c0] sm:$0xff]
    %v869 = vld [vmem:[%s1 + $0x5c8] sm:$0xff]
    %v870 = vld [vmem:[%s1 + $0x5d0] sm:$0xff]
    %v871 = vld [vmem:[%s1 + $0x5d8] sm:$0xff]
    %v872 = vld [vmem:[%s1 + $0x5e0] sm:$0xff]
    %v873 = vld [vmem:[%s1 + $0x5e8] sm:$0xff]
    %v874 = vld [vmem:[%s1 + $0x5f0] sm:$0xff]
    %v875 = vld [vmem:[%s1 + $0x5f8] sm:$0xff]
    %v876 = vld [vmem:[%s1 + $0x600] sm:$0xff]
    %v877 = vld [vmem:[%s1 + $0x608] sm:$0xff]
    %v878 = vld [vmem:[%s1 + $0x610] sm:$0xff]
    %v879 = vld [vmem:[%s1 + $0x618] sm:$0xff]
    %v880 = vld [vmem:[%s1 + $0x620] sm:$0xff]
    %v881 = vld [vmem:[%s1 + $0x628] sm:$0xff]
    %v882 = vld [vmem:[%s1 + $0x630] sm:$0xff]
    %v883 = vld [vmem:[%s1 + $0x638] sm:$0xff]
    %v884 = vld [vmem:[%s1 + $0x640] sm:$0xff]
    %v885 = vld [vmem:[%s1 + $0x648] sm:$0xff]
    %v886 = vld [vmem:[%s1 + $0x650] sm:$0xff]
    %v887 = vld [vmem:[%s1 + $0x658] sm:$0xff]
    %v888 = vld [vmem:[%s1 + $0x660] sm:$0xff]
    %v889 = vld [vmem:[%s1 + $0x668] sm:$0xff]
    %v890 = vld [vmem:[%s1 + $0x670] sm:$0xff]
    %v891 = vld [vmem:[%s1 + $0x678] sm:$0xff]
    %v892 = vld [vmem:[%s1 + $0x680] sm:$0xff]
    %v893 = vld [vmem:[%s1 + $0x688] sm:$0xff]
    %v894 = vld [vmem:[%s1 + $0x690] sm:$0xff]
    %v895 = vld [vmem:[%s1 + $0x698] sm:$0xff]
    %v896 = vld [vmem:[%s1 + $0x6a0] sm:$0xff]
    %v897 = vld [vmem:[%s1 + $0x6a8] sm:$0xff]
    %v898 = vld [vmem:[%s1 + $0x6b0] sm:$0xff]
    %v899 = vld [vmem:[%s1 + $0x6b8] sm:$0xff]
    %v900 = vld [vmem:[%s1 + $0x6c0] sm:$0xff]
    %v901 = vld [vmem:[%s1 + $0x6c8] sm:$0xff]
    %v902 = vld [vmem:[%s1 + $0x6d0] sm:$0xff]
    %v903 = vld [vmem:[%s1 + $0x6d8] sm:$0xff]
    %v904 = vld [vmem:[%s1 + $0x6e0] sm:$0xff]
    %v905 = vld [vmem:[%s1 + $0x6e8] sm:$0xff]
    %v906 = vld [vmem:[%s1 + $0x6f0] sm:$0xff]
    %v907 = vld [vmem:[%s1 + $0x6f8] sm:$0xff]
    %v908 = vld [vmem:[%s1 + $0x700] sm:$0xff]
    %v909 = vld [vmem:[%s1 + $0x708] sm:$0xff]
    %v910 = vld [vmem:[%s1 + $0x710] sm:$0xff]
    %v911 = vld [vmem:[%s1 + $0x718] sm:$0xff]
    %v912 = vld [vmem:[%s1 + $0x720] sm:$0xff]
    %v913 = vld [vmem:[%s1 + $0x728] sm:$0xff]
    %v914 = vld [vmem:[%s1 + $0x730] sm:$0xff]
    %v915 = vld [vmem:[%s1 + $0x738] sm:$0xff]
    %v916 = vld [vmem:[%s1 + $0x740] sm:$0xff]
    %v917 = vld [vmem:[%s1 + $0x748] sm:$0xff]
    %v918 = vld [vmem:[%s1 + $0x750] sm:$0xff]
    %v919 = vld [vmem:[%s1 + $0x758] sm:$0xff]
    %v920 = vld [vmem:[%s1 + $0x760] sm:$0xff]
    %v921 = vld [vmem:[%s1 + $0x768] sm:$0xff]
    %v922 = vld [vmem:[%s1 + $0x770] sm:$0xff]
    %v923 = vld [vmem:[%s1 + $0x778] sm:$0xff]
    %v924 = vld [vmem:[%s1 + $0x780] sm:$0xff]
    %v925 = vld [vmem:[%s1 + $0x788] sm:$0xff]
    %v926 = vld [vmem:[%s1 + $0x790] sm:$0xff]
    %v927 = vld [vmem:[%s1 + $0x798] sm:$0xff]
    %v928 = vld [vmem:[%s1 + $0x7a0] sm:$0xff]
    %v929 = vld [vmem:[%s1 + $0x7a8] sm:$0xff]
    %v930 = vld [vmem:[%s1 + $0x7b0] sm:$0xff]
    %v931 = vld [vmem:[%s1 + $0x7b8] sm:$0xff]
    %v932 = vld [vmem:[%s1 + $0x7c0] sm:$0xff]
    %v933 = vld [vmem:[%s1 + $0x7c8] sm:$0xff]
    %v934 = vld [vmem:[%s1 + $0x7d0] sm:$0xff]
    %v935 = vld [vmem:[%s1 + $0x7d8] sm:$0xff]
    %v936 = vld [vmem:[%s1 + $0x7e0] sm:$0xff]
    %v937 = vld [vmem:[%s1 + $0x7e8] sm:$0xff]
    %v938 = vld [vmem:[%s1 + $0x7f0] sm:$0xff]
    %v939 = vld [vmem:[%s1 + $0x7f8] sm:$0xff]
    %vm972 = vcmask 1041409
    %v973 = vsel %vm972, %v488, %v280
    %v974 = vsel %vm972, %v501, %v293
    %v975 = vsel %vm972, %v514, %v306
    %v976 = vsel %vm972, %v527, %v319
    %v977 = vsel %vm972, %v540, %v332
    %v978 = vsel %vm972, %v553, %v345
    %v979 = vsel %vm972, %v566, %v358
    %v980 = vsel %vm972, %v579, %v371
    %v981 = vsel %vm972, %v592, %v384
    %v982 = vsel %vm972, %v605, %v397
    %v983 = vsel %vm972, %v618, %v410
    %v984 = vsel %vm972, %v631, %v423
    %v985 = vsel %vm972, %v644, %v436
    %v986 = vsel %vm972, %v657, %v449
    %v987 = vsel %vm972, %v670, %v462
    %v988 = vsel %vm972, %v683, %v475
    %1005 = vmatprep.subr.mxu0 0.0
    %1006 = vmatpush1.msra.mxu0 %v699
    %1007 = vmatprep.subr.mxu0 0.0
    %1008 = vmatpush1.msra.mxu0 %v698
    %1009 = vmatprep.subr.mxu0 0.0
    %1010 = vmatpush1.msra.mxu0 %v697
    %1011 = vmatprep.subr.mxu0 0.0
    %1012 = vmatpush1.msra.mxu0 %v696
    %1013 = vmatprep.subr.mxu0 0.0
    %1014 = vmatpush1.msra.mxu0 %v695
    %1015 = vmatprep.subr.mxu0 0.0
    %1016 = vmatpush1.msra.mxu0 %v694
    %1017 = vmatprep.subr.mxu0 0.0
    %1018 = vmatpush1.msra.mxu0 %v693
    %1019 = vmatprep.subr.mxu0 0.0
    %1020 = vmatpush1.msra.mxu0 %v692
    %1021 = vmatprep.subr.mxu0 0.0
    %1022 = vmatpush1.msra.mxu0 %v691
    %1023 = vmatprep.subr.mxu0 0.0
    %1024 = vmatpush1.msra.mxu0 %v690
    %1025 = vmatprep.subr.mxu0 0.0
    %1026 = vmatpush1.msra.mxu0 %v689
    %1027 = vmatprep.subr.mxu0 0.0
    %1028 = vmatpush1.msra.mxu0 %v688
    %1029 = vmatprep.subr.mxu0 0.0
    %1030 = vmatpush1.msra.mxu0 %v687
    %1031 = vmatprep.subr.mxu0 0.0
    %1032 = vmatpush1.msra.mxu0 %v686
    %1033 = vmatprep.subr.mxu0 0.0
    %1034 = vmatpush1.msra.mxu0 %v685
    %1035 = vmatprep.subr.mxu0 0.0
    %1036 = vmatpush1.msra.mxu0 %v684
    %1037 = vmatprep.subr.mxu0 0.0
    %1038 = vmatpush2.msra.mxu0 %v715
    %1039 = vmatprep.subr.mxu0 0.0
    %1040 = vmatpush2.msra.mxu0 %v714
    %1041 = vmatprep.subr.mxu0 0.0
    %1042 = vmatpush2.msra.mxu0 %v713
    %1043 = vmatprep.subr.mxu0 0.0
    %1044 = vmatpush2.msra.mxu0 %v712
    %1045 = vmatprep.subr.mxu0 0.0
    %1046 = vmatpush2.msra.mxu0 %v711
    %1047 = vmatprep.subr.mxu0 0.0
    %1048 = vmatpush2.msra.mxu0 %v710
    %1049 = vmatprep.subr.mxu0 0.0
    %1050 = vmatpush2.msra.mxu0 %v709
    %1051 = vmatprep.subr.mxu0 0.0
    %1052 = vmatpush2.msra.mxu0 %v708
    %1053 = vmatprep.subr.mxu0 0.0
    %1054 = vmatpush2.msra.mxu0 %v707
    %1055 = vmatprep.subr.mxu0 0.0
    %1056 = vmatpush2.msra.mxu0 %v706
    %1057 = vmatprep.subr.mxu0 0.0
    %1058 = vmatpush2.msra.mxu0 %v705
    %1059 = vmatprep.subr.mxu0 0.0
    %1060 = vmatpush2.msra.mxu0 %v704
    %1061 = vmatprep.subr.mxu0 0.0
    %1062 = vmatpush2.msra.mxu0 %v703
    %1063 = vmatprep.subr.mxu0 0.0
    %1064 = vmatpush2.msra.mxu0 %v702
    %1065 = vmatprep.subr.mxu0 0.0
    %1066 = vmatpush2.msra.mxu0 %v701
    %1067 = vmatprep.subr.mxu0 0.0
    %1068 = vmatpush2.msra.mxu0 %v700
    %1069 = vmatprep.mubr.f32.mxu0 %v974
    %1070 = vmatmul.mubr.f32.gmra.mxu0 %v973
    %v1071 = vpop.f32.mrf.mxu0
    %v1072 = vadd.f32 0.0, %v1071
    %v1073 = vpop.f32.mrf.mxu0
    %1074 = vdwg.mxu0
    %1075 = vmatprep.subr.mxu0 0.0
    %1076 = vmatpush1.msra.mxu0 %v731
    %1077 = vmatprep.subr.mxu0 0.0
    %1078 = vmatpush1.msra.mxu0 %v730
    %1079 = vmatprep.subr.mxu0 0.0
    %1080 = vmatpush1.msra.mxu0 %v729
    %1081 = vmatprep.subr.mxu0 0.0
    %1082 = vmatpush1.msra.mxu0 %v728
    %1083 = vmatprep.subr.mxu0 0.0
    %1084 = vmatpush1.msra.mxu0 %v727
    %1085 = vmatprep.subr.mxu0 0.0
    %1086 = vmatpush1.msra.mxu0 %v726
    %1087 = vmatprep.subr.mxu0 0.0
    %1088 = vmatpush1.msra.mxu0 %v725
    %1089 = vmatprep.subr.mxu0 0.0
    %1090 = vmatpush1.msra.mxu0 %v724
    %1091 = vmatprep.subr.mxu0 0.0
    %1092 = vmatpush1.msra.mxu0 %v723
    %1093 = vmatprep.subr.mxu0 0.0
    %1094 = vmatpush1.msra.mxu0 %v722
    %1095 = vmatprep.subr.mxu0 0.0
    %1096 = vmatpush1.msra.mxu0 %v721
    %1097 = vmatprep.subr.mxu0 0.0
    %1098 = vmatpush1.msra.mxu0 %v720
    %1099 = vmatprep.subr.mxu0 0.0
    %1100 = vmatpush1.msra.mxu0 %v719
    %1101 = vmatprep.subr.mxu0 0.0
    %1102 = vmatpush1.msra.mxu0 %v718
    %1103 = vmatprep.subr.mxu0 0.0
    %1104 = vmatpush1.msra.mxu0 %v717
    %1105 = vmatprep.subr.mxu0 0.0
    %1106 = vmatpush1.msra.mxu0 %v716
    %1107 = vmatprep.subr.mxu0 0.0
    %1108 = vmatpush2.msra.mxu0 %v747
    %1109 = vmatprep.subr.mxu0 0.0
    %1110 = vmatpush2.msra.mxu0 %v746
    %1111 = vmatprep.subr.mxu0 0.0
    %1112 = vmatpush2.msra.mxu0 %v745
    %1113 = vmatprep.subr.mxu0 0.0
    %1114 = vmatpush2.msra.mxu0 %v744
    %1115 = vmatprep.subr.mxu0 0.0
    %1116 = vmatpush2.msra.mxu0 %v743
    %1117 = vmatprep.subr.mxu0 0.0
    %1118 = vmatpush2.msra.mxu0 %v742
    %1119 = vmatprep.subr.mxu0 0.0
    %1120 = vmatpush2.msra.mxu0 %v741
    %1121 = vmatprep.subr.mxu0 0.0
    %1122 = vmatpush2.msra.mxu0 %v740
    %1123 = vmatprep.subr.mxu0 0.0
    %1124 = vmatpush2.msra.mxu0 %v739
    %1125 = vmatprep.subr.mxu0 0.0
    %1126 = vmatpush2.msra.mxu0 %v738
    %1127 = vmatprep.subr.mxu0 0.0
    %1128 = vmatpush2.msra.mxu0 %v737
    %1129 = vmatprep.subr.mxu0 0.0
    %1130 = vmatpush2.msra.mxu0 %v736
    %1131 = vmatprep.subr.mxu0 0.0
    %1132 = vmatpush2.msra.mxu0 %v735
    %1133 = vmatprep.subr.mxu0 0.0
    %1134 = vmatpush2.msra.mxu0 %v734
    %1135 = vmatprep.subr.mxu0 0.0
    %1136 = vmatpush2.msra.mxu0 %v733
    %1137 = vmatprep.subr.mxu0 0.0
    %1138 = vmatpush2.msra.mxu0 %v732
    %1139 = vmatprep.mubr.f32.mxu0 %v976
    %1140 = vmatmul.mubr.f32.gmra.mxu0 %v975
    %v1141 = vpop.f32.mrf.mxu0
    %v1142 = vadd.f32 %v1072, %v1141
    %v1143 = vpop.f32.mrf.mxu0
    %1144 = vdwg.mxu0
    %1145 = vmatprep.subr.mxu0 0.0
    %1146 = vmatpush1.msra.mxu0 %v763
    %1147 = vmatprep.subr.mxu0 0.0
    %1148 = vmatpush1.msra.mxu0 %v762
    %1149 = vmatprep.subr.mxu0 0.0
    %1150 = vmatpush1.msra.mxu0 %v761
    %1151 = vmatprep.subr.mxu0 0.0
    %1152 = vmatpush1.msra.mxu0 %v760
    %1153 = vmatprep.subr.mxu0 0.0
    %1154 = vmatpush1.msra.mxu0 %v759
    %1155 = vmatprep.subr.mxu0 0.0
    %1156 = vmatpush1.msra.mxu0 %v758
    %1157 = vmatprep.subr.mxu0 0.0
    %1158 = vmatpush1.msra.mxu0 %v757
    %1159 = vmatprep.subr.mxu0 0.0
    %1160 = vmatpush1.msra.mxu0 %v756
    %1161 = vmatprep.subr.mxu0 0.0
    %1162 = vmatpush1.msra.mxu0 %v755
    %1163 = vmatprep.subr.mxu0 0.0
    %1164 = vmatpush1.msra.mxu0 %v754
    %1165 = vmatprep.subr.mxu0 0.0
    %1166 = vmatpush1.msra.mxu0 %v753
    %1167 = vmatprep.subr.mxu0 0.0
    %1168 = vmatpush1.msra.mxu0 %v752
    %1169 = vmatprep.subr.mxu0 0.0
    %1170 = vmatpush1.msra.mxu0 %v751
    %1171 = vmatprep.subr.mxu0 0.0
    %1172 = vmatpush1.msra.mxu0 %v750
    %1173 = vmatprep.subr.mxu0 0.0
    %1174 = vmatpush1.msra.mxu0 %v749
    %1175 = vmatprep.subr.mxu0 0.0
    %1176 = vmatpush1.msra.mxu0 %v748
    %1177 = vmatprep.subr.mxu0 0.0
    %1178 = vmatpush2.msra.mxu0 %v779
    %1179 = vmatprep.subr.mxu0 0.0
    %1180 = vmatpush2.msra.mxu0 %v778
    %1181 = vmatprep.subr.mxu0 0.0
    %1182 = vmatpush2.msra.mxu0 %v777
    %1183 = vmatprep.subr.mxu0 0.0
    %1184 = vmatpush2.msra.mxu0 %v776
    %1185 = vmatprep.subr.mxu0 0.0
    %1186 = vmatpush2.msra.mxu0 %v775
    %1187 = vmatprep.subr.mxu0 0.0
    %1188 = vmatpush2.msra.mxu0 %v774
    %1189 = vmatprep.subr.mxu0 0.0
    %1190 = vmatpush2.msra.mxu0 %v773
    %1191 = vmatprep.subr.mxu0 0.0
    %1192 = vmatpush2.msra.mxu0 %v772
    %1193 = vmatprep.subr.mxu0 0.0
    %1194 = vmatpush2.msra.mxu0 %v771
    %1195 = vmatprep.subr.mxu0 0.0
    %1196 = vmatpush2.msra.mxu0 %v770
    %1197 = vmatprep.subr.mxu0 0.0
    %1198 = vmatpush2.msra.mxu0 %v769
    %1199 = vmatprep.subr.mxu0 0.0
    %1200 = vmatpush2.msra.mxu0 %v768
    %1201 = vmatprep.subr.mxu0 0.0
    %1202 = vmatpush2.msra.mxu0 %v767
    %1203 = vmatprep.subr.mxu0 0.0
    %1204 = vmatpush2.msra.mxu0 %v766
    %1205 = vmatprep.subr.mxu0 0.0
    %1206 = vmatpush2.msra.mxu0 %v765
    %1207 = vmatprep.subr.mxu0 0.0
    %1208 = vmatpush2.msra.mxu0 %v764
    %1209 = vmatprep.mubr.f32.mxu0 %v978
    %1210 = vmatmul.mubr.f32.gmra.mxu0 %v977
    %v1211 = vpop.f32.mrf.mxu0
    %v1212 = vadd.f32 %v1142, %v1211
    %v1213 = vpop.f32.mrf.mxu0
    %1214 = vdwg.mxu0
    %1215 = vmatprep.subr.mxu0 0.0
    %1216 = vmatpush1.msra.mxu0 %v795
    %1217 = vmatprep.subr.mxu0 0.0
    %1218 = vmatpush1.msra.mxu0 %v794
    %1219 = vmatprep.subr.mxu0 0.0
    %1220 = vmatpush1.msra.mxu0 %v793
    %1221 = vmatprep.subr.mxu0 0.0
    %1222 = vmatpush1.msra.mxu0 %v792
    %1223 = vmatprep.subr.mxu0 0.0
    %1224 = vmatpush1.msra.mxu0 %v791
    %1225 = vmatprep.subr.mxu0 0.0
    %1226 = vmatpush1.msra.mxu0 %v790
    %1227 = vmatprep.subr.mxu0 0.0
    %1228 = vmatpush1.msra.mxu0 %v789
    %1229 = vmatprep.subr.mxu0 0.0
    %1230 = vmatpush1.msra.mxu0 %v788
    %1231 = vmatprep.subr.mxu0 0.0
    %1232 = vmatpush1.msra.mxu0 %v787
    %1233 = vmatprep.subr.mxu0 0.0
    %1234 = vmatpush1.msra.mxu0 %v786
    %1235 = vmatprep.subr.mxu0 0.0
    %1236 = vmatpush1.msra.mxu0 %v785
    %1237 = vmatprep.subr.mxu0 0.0
    %1238 = vmatpush1.msra.mxu0 %v784
    %1239 = vmatprep.subr.mxu0 0.0
    %1240 = vmatpush1.msra.mxu0 %v783
    %1241 = vmatprep.subr.mxu0 0.0
    %1242 = vmatpush1.msra.mxu0 %v782
    %1243 = vmatprep.subr.mxu0 0.0
    %1244 = vmatpush1.msra.mxu0 %v781
    %1245 = vmatprep.subr.mxu0 0.0
    %1246 = vmatpush1.msra.mxu0 %v780
    %1247 = vmatprep.subr.mxu0 0.0
    %1248 = vmatpush2.msra.mxu0 %v811
    %1249 = vmatprep.subr.mxu0 0.0
    %1250 = vmatpush2.msra.mxu0 %v810
    %1251 = vmatprep.subr.mxu0 0.0
    %1252 = vmatpush2.msra.mxu0 %v809
    %1253 = vmatprep.subr.mxu0 0.0
    %1254 = vmatpush2.msra.mxu0 %v808
    %1255 = vmatprep.subr.mxu0 0.0
    %1256 = vmatpush2.msra.mxu0 %v807
    %1257 = vmatprep.subr.mxu0 0.0
    %1258 = vmatpush2.msra.mxu0 %v806
    %1259 = vmatprep.subr.mxu0 0.0
    %1260 = vmatpush2.msra.mxu0 %v805
    %1261 = vmatprep.subr.mxu0 0.0
    %1262 = vmatpush2.msra.mxu0 %v804
    %1263 = vmatprep.subr.mxu0 0.0
    %1264 = vmatpush2.msra.mxu0 %v803
    %1265 = vmatprep.subr.mxu0 0.0
    %1266 = vmatpush2.msra.mxu0 %v802
    %1267 = vmatprep.subr.mxu0 0.0
    %1268 = vmatpush2.msra.mxu0 %v801
    %1269 = vmatprep.subr.mxu0 0.0
    %1270 = vmatpush2.msra.mxu0 %v800
    %1271 = vmatprep.subr.mxu0 0.0
    %1272 = vmatpush2.msra.mxu0 %v799
    %1273 = vmatprep.subr.mxu0 0.0
    %1274 = vmatpush2.msra.mxu0 %v798
    %1275 = vmatprep.subr.mxu0 0.0
    %1276 = vmatpush2.msra.mxu0 %v797
    %1277 = vmatprep.subr.mxu0 0.0
    %1278 = vmatpush2.msra.mxu0 %v796
    %1279 = vmatprep.mubr.f32.mxu0 %v980
    %1280 = vmatmul.mubr.f32.gmra.mxu0 %v979
    %v1281 = vpop.f32.mrf.mxu0
    %v1282 = vadd.f32 %v1212, %v1281
    %v1283 = vpop.f32.mrf.mxu0
    %1284 = vdwg.mxu0
    %1285 = vmatprep.subr.mxu0 0.0
    %1286 = vmatpush1.msra.mxu0 %v827
    %1287 = vmatprep.subr.mxu0 0.0
    %1288 = vmatpush1.msra.mxu0 %v826
    %1289 = vmatprep.subr.mxu0 0.0
    %1290 = vmatpush1.msra.mxu0 %v825
    %1291 = vmatprep.subr.mxu0 0.0
    %1292 = vmatpush1.msra.mxu0 %v824
    %1293 = vmatprep.subr.mxu0 0.0
    %1294 = vmatpush1.msra.mxu0 %v823
    %1295 = vmatprep.subr.mxu0 0.0
    %1296 = vmatpush1.msra.mxu0 %v822
    %1297 = vmatprep.subr.mxu0 0.0
    %1298 = vmatpush1.msra.mxu0 %v821
    %1299 = vmatprep.subr.mxu0 0.0
    %1300 = vmatpush1.msra.mxu0 %v820
    %1301 = vmatprep.subr.mxu0 0.0
    %1302 = vmatpush1.msra.mxu0 %v819
    %1303 = vmatprep.subr.mxu0 0.0
    %1304 = vmatpush1.msra.mxu0 %v818
    %1305 = vmatprep.subr.mxu0 0.0
    %1306 = vmatpush1.msra.mxu0 %v817
    %1307 = vmatprep.subr.mxu0 0.0
    %1308 = vmatpush1.msra.mxu0 %v816
    %1309 = vmatprep.subr.mxu0 0.0
    %1310 = vmatpush1.msra.mxu0 %v815
    %1311 = vmatprep.subr.mxu0 0.0
    %1312 = vmatpush1.msra.mxu0 %v814
    %1313 = vmatprep.subr.mxu0 0.0
    %1314 = vmatpush1.msra.mxu0 %v813
    %1315 = vmatprep.subr.mxu0 0.0
    %1316 = vmatpush1.msra.mxu0 %v812
    %1317 = vmatprep.subr.mxu0 0.0
    %1318 = vmatpush2.msra.mxu0 %v843
    %1319 = vmatprep.subr.mxu0 0.0
    %1320 = vmatpush2.msra.mxu0 %v842
    %1321 = vmatprep.subr.mxu0 0.0
    %1322 = vmatpush2.msra.mxu0 %v841
    %1323 = vmatprep.subr.mxu0 0.0
    %1324 = vmatpush2.msra.mxu0 %v840
    %1325 = vmatprep.subr.mxu0 0.0
    %1326 = vmatpush2.msra.mxu0 %v839
    %1327 = vmatprep.subr.mxu0 0.0
    %1328 = vmatpush2.msra.mxu0 %v838
    %1329 = vmatprep.subr.mxu0 0.0
    %1330 = vmatpush2.msra.mxu0 %v837
    %1331 = vmatprep.subr.mxu0 0.0
    %1332 = vmatpush2.msra.mxu0 %v836
    %1333 = vmatprep.subr.mxu0 0.0
    %1334 = vmatpush2.msra.mxu0 %v835
    %1335 = vmatprep.subr.mxu0 0.0
    %1336 = vmatpush2.msra.mxu0 %v834
    %1337 = vmatprep.subr.mxu0 0.0
    %1338 = vmatpush2.msra.mxu0 %v833
    %1339 = vmatprep.subr.mxu0 0.0
    %1340 = vmatpush2.msra.mxu0 %v832
    %1341 = vmatprep.subr.mxu0 0.0
    %1342 = vmatpush2.msra.mxu0 %v831
    %1343 = vmatprep.subr.mxu0 0.0
    %1344 = vmatpush2.msra.mxu0 %v830
    %1345 = vmatprep.subr.mxu0 0.0
    %1346 = vmatpush2.msra.mxu0 %v829
    %1347 = vmatprep.subr.mxu0 0.0
    %1348 = vmatpush2.msra.mxu0 %v828
    %1349 = vmatprep.mubr.f32.mxu0 %v982
    %1350 = vmatmul.mubr.f32.gmra.mxu0 %v981
    %v1351 = vpop.f32.mrf.mxu0
    %v1352 = vadd.f32 %v1282, %v1351
    %v1353 = vpop.f32.mrf.mxu0
    %1354 = vdwg.mxu0
    %1355 = vmatprep.subr.mxu0 0.0
    %1356 = vmatpush1.msra.mxu0 %v859
    %1357 = vmatprep.subr.mxu0 0.0
    %1358 = vmatpush1.msra.mxu0 %v858
    %1359 = vmatprep.subr.mxu0 0.0
    %1360 = vmatpush1.msra.mxu0 %v857
    %1361 = vmatprep.subr.mxu0 0.0
    %1362 = vmatpush1.msra.mxu0 %v856
    %1363 = vmatprep.subr.mxu0 0.0
    %1364 = vmatpush1.msra.mxu0 %v855
    %1365 = vmatprep.subr.mxu0 0.0
    %1366 = vmatpush1.msra.mxu0 %v854
    %1367 = vmatprep.subr.mxu0 0.0
    %1368 = vmatpush1.msra.mxu0 %v853
    %1369 = vmatprep.subr.mxu0 0.0
    %1370 = vmatpush1.msra.mxu0 %v852
    %1371 = vmatprep.subr.mxu0 0.0
    %1372 = vmatpush1.msra.mxu0 %v851
    %1373 = vmatprep.subr.mxu0 0.0
    %1374 = vmatpush1.msra.mxu0 %v850
    %1375 = vmatprep.subr.mxu0 0.0
    %1376 = vmatpush1.msra.mxu0 %v849
    %1377 = vmatprep.subr.mxu0 0.0
    %1378 = vmatpush1.msra.mxu0 %v848
    %1379 = vmatprep.subr.mxu0 0.0
    %1380 = vmatpush1.msra.mxu0 %v847
    %1381 = vmatprep.subr.mxu0 0.0
    %1382 = vmatpush1.msra.mxu0 %v846
    %1383 = vmatprep.subr.mxu0 0.0
    %1384 = vmatpush1.msra.mxu0 %v845
    %1385 = vmatprep.subr.mxu0 0.0
    %1386 = vmatpush1.msra.mxu0 %v844
    %1387 = vmatprep.subr.mxu0 0.0
    %1388 = vmatpush2.msra.mxu0 %v875
    %1389 = vmatprep.subr.mxu0 0.0
    %1390 = vmatpush2.msra.mxu0 %v874
    %1391 = vmatprep.subr.mxu0 0.0
    %1392 = vmatpush2.msra.mxu0 %v873
    %1393 = vmatprep.subr.mxu0 0.0
    %1394 = vmatpush2.msra.mxu0 %v872
    %1395 = vmatprep.subr.mxu0 0.0
    %1396 = vmatpush2.msra.mxu0 %v871
    %1397 = vmatprep.subr.mxu0 0.0
    %1398 = vmatpush2.msra.mxu0 %v870
    %1399 = vmatprep.subr.mxu0 0.0
    %1400 = vmatpush2.msra.mxu0 %v869
    %1401 = vmatprep.subr.mxu0 0.0
    %1402 = vmatpush2.msra.mxu0 %v868
    %1403 = vmatprep.subr.mxu0 0.0
    %1404 = vmatpush2.msra.mxu0 %v867
    %1405 = vmatprep.subr.mxu0 0.0
    %1406 = vmatpush2.msra.mxu0 %v866
    %1407 = vmatprep.subr.mxu0 0.0
    %1408 = vmatpush2.msra.mxu0 %v865
    %1409 = vmatprep.subr.mxu0 0.0
    %1410 = vmatpush2.msra.mxu0 %v864
    %1411 = vmatprep.subr.mxu0 0.0
    %1412 = vmatpush2.msra.mxu0 %v863
    %1413 = vmatprep.subr.mxu0 0.0
    %1414 = vmatpush2.msra.mxu0 %v862
    %1415 = vmatprep.subr.mxu0 0.0
    %1416 = vmatpush2.msra.mxu0 %v861
    %1417 = vmatprep.subr.mxu0 0.0
    %1418 = vmatpush2.msra.mxu0 %v860
    %1419 = vmatprep.mubr.f32.mxu0 %v984
    %1420 = vmatmul.mubr.f32.gmra.mxu0 %v983
    %v1421 = vpop.f32.mrf.mxu0
    %v1422 = vadd.f32 %v1352, %v1421
    %v1423 = vpop.f32.mrf.mxu0
    %1424 = vdwg.mxu0
    %1425 = vmatprep.subr.mxu0 0.0
    %1426 = vmatpush1.msra.mxu0 %v891
    %1427 = vmatprep.subr.mxu0 0.0
    %1428 = vmatpush1.msra.mxu0 %v890
    %1429 = vmatprep.subr.mxu0 0.0
    %1430 = vmatpush1.msra.mxu0 %v889
    %1431 = vmatprep.subr.mxu0 0.0
    %1432 = vmatpush1.msra.mxu0 %v888
    %1433 = vmatprep.subr.mxu0 0.0
    %1434 = vmatpush1.msra.mxu0 %v887
    %1435 = vmatprep.subr.mxu0 0.0
    %1436 = vmatpush1.msra.mxu0 %v886
    %1437 = vmatprep.subr.mxu0 0.0
    %1438 = vmatpush1.msra.mxu0 %v885
    %1439 = vmatprep.subr.mxu0 0.0
    %1440 = vmatpush1.msra.mxu0 %v884
    %1441 = vmatprep.subr.mxu0 0.0
    %1442 = vmatpush1.msra.mxu0 %v883
    %1443 = vmatprep.subr.mxu0 0.0
    %1444 = vmatpush1.msra.mxu0 %v882
    %1445 = vmatprep.subr.mxu0 0.0
    %1446 = vmatpush1.msra.mxu0 %v881
    %1447 = vmatprep.subr.mxu0 0.0
    %1448 = vmatpush1.msra.mxu0 %v880
    %1449 = vmatprep.subr.mxu0 0.0
    %1450 = vmatpush1.msra.mxu0 %v879
    %1451 = vmatprep.subr.mxu0 0.0
    %1452 = vmatpush1.msra.mxu0 %v878
    %1453 = vmatprep.subr.mxu0 0.0
    %1454 = vmatpush1.msra.mxu0 %v877
    %1455 = vmatprep.subr.mxu0 0.0
    %1456 = vmatpush1.msra.mxu0 %v876
    %1457 = vmatprep.subr.mxu0 0.0
    %1458 = vmatpush2.msra.mxu0 %v907
    %1459 = vmatprep.subr.mxu0 0.0
    %1460 = vmatpush2.msra.mxu0 %v906
    %1461 = vmatprep.subr.mxu0 0.0
    %1462 = vmatpush2.msra.mxu0 %v905
    %1463 = vmatprep.subr.mxu0 0.0
    %1464 = vmatpush2.msra.mxu0 %v904
    %1465 = vmatprep.subr.mxu0 0.0
    %1466 = vmatpush2.msra.mxu0 %v903
    %1467 = vmatprep.subr.mxu0 0.0
    %1468 = vmatpush2.msra.mxu0 %v902
    %1469 = vmatprep.subr.mxu0 0.0
    %1470 = vmatpush2.msra.mxu0 %v901
    %1471 = vmatprep.subr.mxu0 0.0
    %1472 = vmatpush2.msra.mxu0 %v900
    %1473 = vmatprep.subr.mxu0 0.0
    %1474 = vmatpush2.msra.mxu0 %v899
    %1475 = vmatprep.subr.mxu0 0.0
    %1476 = vmatpush2.msra.mxu0 %v898
    %1477 = vmatprep.subr.mxu0 0.0
    %1478 = vmatpush2.msra.mxu0 %v897
    %1479 = vmatprep.subr.mxu0 0.0
    %1480 = vmatpush2.msra.mxu0 %v896
    %1481 = vmatprep.subr.mxu0 0.0
    %1482 = vmatpush2.msra.mxu0 %v895
    %1483 = vmatprep.subr.mxu0 0.0
    %1484 = vmatpush2.msra.mxu0 %v894
    %1485 = vmatprep.subr.mxu0 0.0
    %1486 = vmatpush2.msra.mxu0 %v893
    %1487 = vmatprep.subr.mxu0 0.0
    %1488 = vmatpush2.msra.mxu0 %v892
    %1489 = vmatprep.mubr.f32.mxu0 %v986
    %1490 = vmatmul.mubr.f32.gmra.mxu0 %v985
    %v1491 = vpop.f32.mrf.mxu0
    %v1492 = vadd.f32 %v1422, %v1491
    %v1493 = vpop.f32.mrf.mxu0
    %1494 = vdwg.mxu0
    %1495 = vmatprep.subr.mxu0 0.0
    %1496 = vmatpush1.msra.mxu0 %v923
    %1497 = vmatprep.subr.mxu0 0.0
    %1498 = vmatpush1.msra.mxu0 %v922
    %1499 = vmatprep.subr.mxu0 0.0
    %1500 = vmatpush1.msra.mxu0 %v921
    %1501 = vmatprep.subr.mxu0 0.0
    %1502 = vmatpush1.msra.mxu0 %v920
    %1503 = vmatprep.subr.mxu0 0.0
    %1504 = vmatpush1.msra.mxu0 %v919
    %1505 = vmatprep.subr.mxu0 0.0
    %1506 = vmatpush1.msra.mxu0 %v918
    %1507 = vmatprep.subr.mxu0 0.0
    %1508 = vmatpush1.msra.mxu0 %v917
    %1509 = vmatprep.subr.mxu0 0.0
    %1510 = vmatpush1.msra.mxu0 %v916
    %1511 = vmatprep.subr.mxu0 0.0
    %1512 = vmatpush1.msra.mxu0 %v915
    %1513 = vmatprep.subr.mxu0 0.0
    %1514 = vmatpush1.msra.mxu0 %v914
    %1515 = vmatprep.subr.mxu0 0.0
    %1516 = vmatpush1.msra.mxu0 %v913
    %1517 = vmatprep.subr.mxu0 0.0
    %1518 = vmatpush1.msra.mxu0 %v912
    %1519 = vmatprep.subr.mxu0 0.0
    %1520 = vmatpush1.msra.mxu0 %v911
    %1521 = vmatprep.subr.mxu0 0.0
    %1522 = vmatpush1.msra.mxu0 %v910
    %1523 = vmatprep.subr.mxu0 0.0
    %1524 = vmatpush1.msra.mxu0 %v909
    %1525 = vmatprep.subr.mxu0 0.0
    %1526 = vmatpush1.msra.mxu0 %v908
    %1527 = vmatprep.subr.mxu0 0.0
    %1528 = vmatpush2.msra.mxu0 %v939
    %1529 = vmatprep.subr.mxu0 0.0
    %1530 = vmatpush2.msra.mxu0 %v938
    %1531 = vmatprep.subr.mxu0 0.0
    %1532 = vmatpush2.msra.mxu0 %v937
    %1533 = vmatprep.subr.mxu0 0.0
    %1534 = vmatpush2.msra.mxu0 %v936
    %1535 = vmatprep.subr.mxu0 0.0
    %1536 = vmatpush2.msra.mxu0 %v935
    %1537 = vmatprep.subr.mxu0 0.0
    %1538 = vmatpush2.msra.mxu0 %v934
    %1539 = vmatprep.subr.mxu0 0.0
    %1540 = vmatpush2.msra.mxu0 %v933
    %1541 = vmatprep.subr.mxu0 0.0
    %1542 = vmatpush2.msra.mxu0 %v932
    %1543 = vmatprep.subr.mxu0 0.0
    %1544 = vmatpush2.msra.mxu0 %v931
    %1545 = vmatprep.subr.mxu0 0.0
    %1546 = vmatpush2.msra.mxu0 %v930
    %1547 = vmatprep.subr.mxu0 0.0
    %1548 = vmatpush2.msra.mxu0 %v929
    %1549 = vmatprep.subr.mxu0 0.0
    %1550 = vmatpush2.msra.mxu0 %v928
    %1551 = vmatprep.subr.mxu0 0.0
    %1552 = vmatpush2.msra.mxu0 %v927
    %1553 = vmatprep.subr.mxu0 0.0
    %1554 = vmatpush2.msra.mxu0 %v926
    %1555 = vmatprep.subr.mxu0 0.0
    %1556 = vmatpush2.msra.mxu0 %v925
    %1557 = vmatprep.subr.mxu0 0.0
    %1558 = vmatpush2.msra.mxu0 %v924
    %1559 = vmatprep.mubr.f32.mxu0 %v988
    %1560 = vmatmul.mubr.f32.gmra.mxu0 %v987
    %v1561 = vpop.f32.mrf.mxu0
    %v1562 = vadd.f32 %v1492, %v1561
    %v1563 = vpop.f32.mrf.mxu0
    %1564 = vdwg.mxu0
    %v1565 = vmul.f32 %v1562, 0.015625
    %1566 = vst [vmem:[#allocation2] sm:$0x3] %v1565
    // Predicated region
    $region10: #{image_embeddings.1} parent=1 // pred_check
      _
    $region11: #{image_embeddings.1} parent=1 // pred_check_branch
      %1568 = sbr.rel (0) target = $region13
    $region12: #{image_embeddings.1} parent=1 // pred_region
      %s1570 = ssub.s32 32, 32
      %1571 = vsyncadd [#allocation3], %s1570
      %s1573 = sshll.u32 [#allocation2], 4
      %s1574 = int_to_ptr.vmem [resolvable:$true] %s1573
      %1576 = dma.vmem_to_hbm [thread:$0]  %s1574, 32, %s2, [#allocation3]
    $region13: #{image_embeddings.1} parent=1 // pred_fallthru
      _
    // Predicated region
    $region14: #{image_embeddings.1} parent=1 // pred_check
      _
    $region15: #{image_embeddings.1} parent=1 // pred_check_branch
      %1578 = sbr.rel (0) target = $region17
    $region16: #{image_embeddings.1} parent=1 // pred_region
      %1579 = dma.done [#allocation3], 32
    $region17: #{image_embeddings.1} parent=1 // pred_fallthru
      _
    %1580 = vsyncpa [#allocation3], 1

</llo_original>
